<compile_context>
chip_gen: v5e
topology: v5e:2x2
jax: 0.10.0
libtpu: 0.0.40
codegen_flags: <defaults>
</compile_context>

<pallas_src>
import functools

import jax
import jax.numpy as jnp
import numpy as np
from jax.experimental import pallas as pl
from jax.experimental.pallas import tpu as pltpu

EPS = 1e-5


# ----------------------------------------------------------------------------
# Fused kernel: conv1+BN+ReLU -> conv2+BN+ReLU -> fc1 -> fc2 -> log_softmax
# ----------------------------------------------------------------------------
def _fused_net_kernel(
    p1_ref,   # (9, 4*64*N) bf16 : conv1 patches on the parity-split padded grid
    m1_ref,   # (1, 4*64*N) f32  : 1 at real conv1 output cells, 0 at padding cells
    m2_ref,   # (1,   64*N) f32  : 1 at real conv2 output cells (7x7 of 8x8 grid)
    w1_ref,   # (6, 9)  bf16     : conv1 weights, cols ordered ki*3+kj
    g1_ref, b1_ref,               # (6, 1) f32 : BN1 gamma / beta
    w2_ref,   # (144, 6) bf16    : conv2 weights, rows ordered (ki,kj,co), cols ci
    g2_ref, b2_ref,               # (16, 1) f32 : BN2 gamma / beta
    wf1_ref,  # (1024, 32) bf16  : fc1 weights in grid-flatten order (zeroed pads)
    bf1_ref,  # (1, 32) f32
    wf2_ref,  # (32, 10) bf16
    bf2_ref,  # (1, 10) f32
    out_ref,  # (N, 10) f32      : log_softmax output
    logit_ref,                    # (N, 10) f32 : pre-softmax logits
    y2_ref,   # scratch (16, 64*N) f32 : conv2 accumulator on the 8x8 grid
    xfc_ref,  # scratch (N, 1024) f32  : fc1 input (channels-major flatten)
):
    n_batch = xfc_ref.shape[0]
    lc = 64 * n_batch                      # lanes per parity class (8x8 grid / sample)

    # ---- conv1 (1->6, k3 s2 p1): one matmul over the 9 kernel taps ----------
    # (no conv bias: it is cancelled exactly by the batch-stat BN that follows)
    y1 = jnp.dot(w1_ref[...], p1_ref[...],
                 preferred_element_type=jnp.float32)        # (6, 4*lc)
    m1 = m1_ref[...]                                        # (1, 4*lc)

    # ---- BN1 (batch stats, single pass) + ReLU ------------------------------
    cnt1 = float(n_batch * 196)                             # real 14x14 positions
    y1m = y1 * m1                                           # zero the pad cells
    mean1 = jnp.sum(y1m, axis=1, keepdims=True) / cnt1
    var1 = jnp.sum(y1m * y1m, axis=1, keepdims=True) / cnt1 - mean1 * mean1
    scale1 = g1_ref[...] * jax.lax.rsqrt(var1 + EPS)
    shift1 = b1_ref[...] - mean1 * scale1
    # mask again so the padded grid cells are exact zeros (= conv2's zero padding)
    z1 = jnp.maximum(y1 * scale1 + shift1, 0.0) * m1        # (6, 4*lc) f32
    z1b = z1.astype(jnp.bfloat16)
    w2all = w2_ref[...]                                     # (144, 6) bf16

    # ---- conv2 (6->16, k3 s2 p1): 9 taps = parity-class slice + lane shift ---
    y2_ref[...] = jnp.zeros_like(y2_ref)
    for ki in range(3):
        for kj in range(3):
            cls = (ki % 2) * 2 + (kj % 2)                   # parity class of this tap
            s = (ki // 2) * 8 + (kj // 2)                   # static lane shift on 8x8 grid
            blk = z1b[:, cls * lc:(cls + 1) * lc]           # (6, lc)
            w2k = w2all[(ki * 3 + kj) * 16:(ki * 3 + kj + 1) * 16, :]   # (16, 6)
            contrib = jnp.dot(w2k, blk,
                              preferred_element_type=jnp.float32)        # (16, lc)
            span = lc - s
            y2_ref[:, 0:span] = y2_ref[:, 0:span] + contrib[:, s:s + span]

    # ---- BN2 (batch stats, single pass) + ReLU ------------------------------
    y2 = y2_ref[...]                                        # (16, lc)
    m2 = m2_ref[...]                                        # (1, lc)
    cnt2 = float(n_batch * 49)                              # real 7x7 positions
    y2m = y2 * m2
    mean2 = jnp.sum(y2m, axis=1, keepdims=True) / cnt2
    var2 = jnp.sum(y2m * y2m, axis=1, keepdims=True) / cnt2 - mean2 * mean2
    scale2 = g2_ref[...] * jax.lax.rsqrt(var2 + EPS)
    shift2 = b2_ref[...] - mean2 * scale2
    # garbage grid cells (gh==7 or gw==7) are neutralised by zero rows in wf1.
    z2 = jnp.maximum(y2 * scale2 + shift2, 0.0)             # (16, lc) f32

    # ---- flatten to (N, 16*64): 32 static (1,64) sliver copies ---------------
    for n in range(n_batch):
        for c in range(16):
            xfc_ref[n:n + 1, c * 64:(c + 1) * 64] = z2[c:c + 1, n * 64:(n + 1) * 64]

    # ---- fc1 -> fc2 -> log_softmax ------------------------------------------
    xfc = xfc_ref[...].astype(jnp.bfloat16)                  # (N, 1024)
    h = jnp.dot(xfc, wf1_ref[...],
                preferred_element_type=jnp.float32) + bf1_ref[...]        # (N, 32)
    logits = jnp.dot(h.astype(jnp.bfloat16), wf2_ref[...],
                     preferred_element_type=jnp.float32) + bf2_ref[...]   # (N, 10)
    logit_ref[...] = logits
    mmax = jnp.max(logits, axis=1, keepdims=True)
    lse = jnp.log(jnp.sum(jnp.exp(logits - mmax), axis=1, keepdims=True)) + mmax
    out_ref[...] = logits - lse


# ----------------------------------------------------------------------------
# Host-side glue (runs once per forward, before the single kernel)
# ----------------------------------------------------------------------------
def _conv1_patches_and_masks(x):
    """Parity-split padded conv1 patch grid + validity masks.

    Grid columns are ordered (parity class (hp,wp), sample n, h2, w2), with an
    8x8 (h2,w2) grid per class per sample.  Padded-plane coordinate of a cell
    is (2*h2+hp, 2*w2+wp), which covers the full 16x16 zero-padded conv1-output
    plane that conv2 reads; every stride-2 3x3 tap of conv2 then becomes a
    contiguous lane slice of one parity class plus a static lane shift.
    """
    n_batch = x.shape[0]
    xp = jnp.pad(x[:, 0], ((0, 0), (3, 3), (3, 3)))         # (N, 34, 34)
    rows = []
    for ki in range(3):
        for kj in range(3):
            per_class = []
            for hp in range(2):
                for wp in range(2):
                    bh, bw = 2 * hp + ki, 2 * wp + kj
                    per_class.append(xp[:, bh:bh + 29:4, bw:bw + 29:4])   # (N,8,8)
            rows.append(jnp.stack(per_class, axis=0).reshape(-1))
    patches = jnp.stack(rows, axis=0).astype(jnp.bfloat16)   # (9, 4*N*64)

    vh = np.zeros((2, 8), np.float32)
    vh[0, 1:] = 1.0        # class hp=0 holds conv1 rows 1,3,...,13 at h2=1..7
    vh[1, :7] = 1.0        # class hp=1 holds conv1 rows 0,2,...,12 at h2=0..6
    mcls = vh[:, None, :, None] * vh[None, :, None, :]                     # (2,2,8,8)
    mask1 = np.broadcast_to(mcls[:, :, None], (2, 2, n_batch, 8, 8)).reshape(1, -1)
    mreal = np.zeros((8, 8), np.float32)
    mreal[:7, :7] = 1.0
    mask2 = np.broadcast_to(mreal[None], (n_batch, 8, 8)).reshape(1, -1)
    return patches, jnp.asarray(mask1), jnp.asarray(mask2)


def prepare_params(p):
    """One-time parameter prep: transposes, bf16 casts, flatten permutation.

    NOTE: conv biases are intentionally dropped - BatchNorm with batch
    statistics subtracts the per-channel mean, so a per-channel additive conv
    bias cancels exactly.
    """
    f32, bf16 = jnp.float32, jnp.bfloat16
    w1 = p["conv1_w"].reshape(6, 9).astype(bf16)                            # (co, ki*3+kj)
    w2 = p["conv2_w"].transpose(2, 3, 0, 1).reshape(9 * 16, 6).astype(bf16)  # ((ki,kj,co), ci)
    # fc1: PyTorch flatten order is c*49 + oh*7 + ow; kernel feature order is
    # c*64 + gh*8 + gw over the 8x8 grid -> embed weights, zero the pad cells.
    wf1 = p["fc1_w"].T.reshape(16, 7, 7, 32)
    wf1 = jnp.zeros((16, 8, 8, 32), f32).at[:, :7, :7, :].set(wf1)
    wf1 = wf1.reshape(16 * 64, 32).astype(bf16)
    return {
        "w1": w1,
        "g1": p["bn1_g"].reshape(6, 1).astype(f32),
        "b1": p["bn1_b"].reshape(6, 1).astype(f32),
        "w2": w2,
        "g2": p["bn2_g"].reshape(16, 1).astype(f32),
        "b2": p["bn2_b"].reshape(16, 1).astype(f32),
        "wf1": wf1,
        "bf1": p["fc1_b"].reshape(1, 32).astype(f32),
        "wf2": p["fc2_w"].T.astype(bf16),                                    # (32, 10)
        "bf2": p["fc2_b"].reshape(1, 10).astype(f32),
    }


def _vmem():
    return pl.BlockSpec(memory_space=pltpu.MemorySpace.VMEM)


@functools.partial(jax.jit, static_argnames=("logit",))
def net_forward(prepped, x, logit=False):
    """Equivalent of Net.forward(x, start_layer_idx=0, logit=logit) for 'mnist'."""
    n_batch = x.shape[0]
    patches, mask1, mask2 = _conv1_patches_and_masks(x)
    out, logit_val = pl.pallas_call(
        _fused_net_kernel,
        out_shape=(
            jax.ShapeDtypeStruct((n_batch, 10), jnp.float32),
            jax.ShapeDtypeStruct((n_batch, 10), jnp.float32),
        ),
        in_specs=[_vmem() for _ in range(13)],
        out_specs=(_vmem(), _vmem()),
        scratch_shapes=[
            pltpu.VMEM((16, 64 * n_batch), jnp.float32),   # conv2 accumulator
            pltpu.VMEM((n_batch, 1024), jnp.float32),      # fc1 input slab
        ],
        compiler_params=pltpu.CompilerParams(vmem_limit_bytes=32 * 1024 * 1024),
    )(
        patches, mask1, mask2,
        prepped["w1"], prepped["g1"], prepped["b1"],
        prepped["w2"], prepped["g2"], prepped["b2"],
        prepped["wf1"], prepped["bf1"], prepped["wf2"], prepped["bf2"],
    )
    results = {"output": out}                               # output_dim=10 > 1
    if logit:
        results["logit"] = logit_val
    return results


# ----------------------------------------------------------------------------
# Parameters (deterministic, torch-like shapes for 'mnist')
# ----------------------------------------------------------------------------
def init_params(key):
    ks = jax.random.split(key, 6)
    return {
        "conv1_w": jax.random.normal(ks[0], (6, 1, 3, 3), jnp.float32) * 0.1,
        "conv1_b": jax.random.normal(ks[1], (6,), jnp.float32) * 0.01,
        "bn1_g": jnp.ones((6,), jnp.float32),
        "bn1_b": jnp.zeros((6,), jnp.float32),
        "conv2_w": jax.random.normal(ks[2], (16, 6, 3, 3), jnp.float32) * 0.1,
        "conv2_b": jax.random.normal(ks[3], (16,), jnp.float32) * 0.01,
        "bn2_g": jnp.ones((16,), jnp.float32),
        "bn2_b": jnp.zeros((16,), jnp.float32),
        "fc1_w": jax.random.normal(ks[4], (32, 784), jnp.float32) * 0.05,
        "fc1_b": jnp.zeros((32,), jnp.float32),
        "fc2_w": jax.random.normal(ks[5], (10, 32), jnp.float32) * 0.1,
        "fc2_b": jnp.zeros((10,), jnp.float32),
    }


# ----------------------------------------------------------------------------
# Pure-JAX f32 reference (includes the conv biases that BN cancels)
# ----------------------------------------------------------------------------
def reference_forward(params, x):
    def conv(x, w, b):
        y = jax.lax.conv_general_dilated(
            x, w, window_strides=(2, 2), padding=((1, 1), (1, 1)),
            dimension_numbers=("NCHW", "OIHW", "NCHW"))
        return y + b[None, :, None, None]

    def bn_relu(y, g, bta):
        mean = jnp.mean(y, axis=(0, 2, 3), keepdims=True)
        var = jnp.mean((y - mean) ** 2, axis=(0, 2, 3), keepdims=True)
        z = (y - mean) / jnp.sqrt(var + EPS)
        z = z * g[None, :, None, None] + bta[None, :, None, None]
        return jnp.maximum(z, 0.0)

    z = bn_relu(conv(x, params["conv1_w"], params["conv1_b"]),
                params["bn1_g"], params["bn1_b"])
    z = bn_relu(conv(z, params["conv2_w"], params["conv2_b"]),
                params["bn2_g"], params["bn2_b"])
    z = z.reshape(z.shape[0], -1)
    z = z @ params["fc1_w"].T + params["fc1_b"]
    z = z @ params["fc2_w"].T + params["fc2_b"]
    return jax.nn.log_softmax(z, axis=1), z


if __name__ == "__main__":
    key = jax.random.PRNGKey(0)
    pkey, xkey = jax.random.split(key)
    params = init_params(pkey)
    prepped = prepare_params(params)

    # MNIST-shaped input (hidden_dim=784 == 16*7*7 requires 28x28 spatial).
    x = jax.random.normal(xkey, (2, 1, 28, 28), jnp.float32)

    results = net_forward(prepped, x, logit=True)
    out = jax.block_until_ready(results["output"])
    logit_val = jax.block_until_ready(results["logit"])

    ref_out, ref_logit = reference_forward(params, x)
    # Kernel deliberately uses bf16 MXU operands (f32 accumulation), so compare
    # against the f32 reference with an fp16-class tolerance.
    np.testing.assert_allclose(np.asarray(out), np.asarray(ref_out),
                               rtol=5e-2, atol=5e-2)
    np.testing.assert_allclose(np.asarray(logit_val), np.asarray(ref_logit),
                               rtol=5e-2, atol=5e-2)
    # log-probabilities must normalise exactly (f32 softmax math in-kernel).
    np.testing.assert_allclose(np.exp(np.asarray(out)).sum(axis=1),
                               np.ones(x.shape[0]), rtol=1e-3, atol=1e-3)
    assert out.shape == (2, 10)

    print("KERNEL_OK")
</pallas_src>

<mosaic_0001>
module attributes {stable_mosaic.version = 11 : i64} {
  func.func @_fused_net_kernel(%arg0: memref<9x512xbf16, #tpu.memory_space<vmem>>, %arg1: memref<1x512xf32, #tpu.memory_space<vmem>>, %arg2: memref<1x128xf32, #tpu.memory_space<vmem>>, %arg3: memref<6x9xbf16, #tpu.memory_space<vmem>>, %arg4: memref<6x1xf32, #tpu.memory_space<vmem>>, %arg5: memref<6x1xf32, #tpu.memory_space<vmem>>, %arg6: memref<144x6xbf16, #tpu.memory_space<vmem>>, %arg7: memref<16x1xf32, #tpu.memory_space<vmem>>, %arg8: memref<16x1xf32, #tpu.memory_space<vmem>>, %arg9: memref<1024x32xbf16, #tpu.memory_space<vmem>>, %arg10: memref<1x32xf32, #tpu.memory_space<vmem>>, %arg11: memref<32x10xbf16, #tpu.memory_space<vmem>>, %arg12: memref<1x10xf32, #tpu.memory_space<vmem>>, %arg13: memref<2x10xf32, #tpu.memory_space<vmem>>, %arg14: memref<2x10xf32, #tpu.memory_space<vmem>>, %arg15: memref<16x128xf32, #tpu.memory_space<vmem>>, %arg16: memref<2x1024xf32, #tpu.memory_space<vmem>>) attributes {dimension_semantics = [], scalar_prefetch = 0 : i64, scratch_operands = 2 : i64, tpu.core_type = #tpu.core_type<tc>} {
    %c0 = arith.constant 0 : index
    %c0_0 = arith.constant 0 : index
    %0 = vector.load %arg3[%c0, %c0_0] : memref<6x9xbf16, #tpu.memory_space<vmem>>, vector<6x9xbf16>
    %c0_1 = arith.constant 0 : index
    %c0_2 = arith.constant 0 : index
    %1 = vector.load %arg0[%c0_1, %c0_2] : memref<9x512xbf16, #tpu.memory_space<vmem>>, vector<9x512xbf16>
    %cst = arith.constant dense<0.000000e+00> : vector<6x512xf32>
    %2 = tpu.matmul %0, %1, %cst {dimension_numbers = #tpu.dot_dimension_numbers<[1], [0], [0], [1], [0, 0, 1, 1], [], []>} : vector<6x9xbf16>, vector<9x512xbf16>, vector<6x512xf32> -> vector<6x512xf32>
    %c0_3 = arith.constant 0 : index
    %c0_4 = arith.constant 0 : index
    %3 = vector.load %arg1[%c0_3, %c0_4] : memref<1x512xf32, #tpu.memory_space<vmem>>, vector<1x512xf32>
    %4 = vector.broadcast %3 : vector<1x512xf32> to vector<6x512xf32>
    %5 = arith.mulf %2, %4 : vector<6x512xf32>
    %cst_5 = arith.constant dense<0.000000e+00> : vector<6xf32>
    %6 = vector.multi_reduction <add>, %5, %cst_5 [1] : vector<6x512xf32> to vector<6xf32>
    %7 = vector.shape_cast %6 : vector<6xf32> to vector<6x1xf32>
    %cst_6 = arith.constant 3.920000e+02 : f32
    %8 = vector.broadcast %cst_6 : f32 to vector<6x1xf32>
    %9 = arith.divf %7, %8 : vector<6x1xf32>
    %10 = arith.mulf %5, %5 : vector<6x512xf32>
    %cst_7 = arith.constant dense<0.000000e+00> : vector<6xf32>
    %11 = vector.multi_reduction <add>, %10, %cst_7 [1] : vector<6x512xf32> to vector<6xf32>
    %12 = vector.shape_cast %11 : vector<6xf32> to vector<6x1xf32>
    %cst_8 = arith.constant 3.920000e+02 : f32
    %13 = vector.broadcast %cst_8 : f32 to vector<6x1xf32>
    %14 = arith.divf %12, %13 : vector<6x1xf32>
    %15 = arith.mulf %9, %9 : vector<6x1xf32>
    %16 = arith.subf %14, %15 : vector<6x1xf32>
    %c0_9 = arith.constant 0 : index
    %c0_10 = arith.constant 0 : index
    %17 = vector.load %arg4[%c0_9, %c0_10] : memref<6x1xf32, #tpu.memory_space<vmem>>, vector<6x1xf32>
    %cst_11 = arith.constant 9.99999974E-6 : f32
    %18 = vector.broadcast %cst_11 : f32 to vector<6x1xf32>
    %19 = arith.addf %16, %18 : vector<6x1xf32>
    %20 = math.rsqrt %19 : vector<6x1xf32>
    %21 = arith.mulf %17, %20 : vector<6x1xf32>
    %c0_12 = arith.constant 0 : index
    %c0_13 = arith.constant 0 : index
    %22 = vector.load %arg5[%c0_12, %c0_13] : memref<6x1xf32, #tpu.memory_space<vmem>>, vector<6x1xf32>
    %23 = arith.mulf %9, %21 : vector<6x1xf32>
    %24 = arith.subf %22, %23 : vector<6x1xf32>
    %25 = vector.broadcast %21 : vector<6x1xf32> to vector<6x512xf32>
    %26 = arith.mulf %2, %25 : vector<6x512xf32>
    %27 = vector.broadcast %24 : vector<6x1xf32> to vector<6x512xf32>
    %28 = arith.addf %26, %27 : vector<6x512xf32>
    %cst_14 = arith.constant 0.000000e+00 : f32
    %29 = vector.broadcast %cst_14 : f32 to vector<6x512xf32>
    %30 = arith.maximumf %28, %29 : vector<6x512xf32>
    %31 = vector.broadcast %3 : vector<1x512xf32> to vector<6x512xf32>
    %32 = arith.mulf %30, %31 : vector<6x512xf32>
    %33 = arith.truncf %32 : vector<6x512xf32> to vector<6x512xbf16>
    %c0_15 = arith.constant 0 : index
    %c0_16 = arith.constant 0 : index
    %34 = vector.load %arg6[%c0_15, %c0_16] : memref<144x6xbf16, #tpu.memory_space<vmem>>, vector<144x6xbf16>
    %cst_17 = arith.constant 0.000000e+00 : f32
    %35 = vector.broadcast %cst_17 : f32 to vector<16x128xf32>
    %c0_18 = arith.constant 0 : index
    %c0_19 = arith.constant 0 : index
    %36 = vector.load %arg15[%c0_18, %c0_19] : memref<16x128xf32, #tpu.memory_space<vmem>>, vector<16x128xf32>
    tpu.vector_store %arg15[%c0_18, %c0_19], %35 {strides = array<i32>} : memref<16x128xf32, #tpu.memory_space<vmem>>, vector<16x128xf32>,
    %37 = vector.extract_strided_slice %33 {offsets = [0, 0], sizes = [6, 128], strides = [1, 1]} : vector<6x512xbf16> to vector<6x128xbf16>
    %38 = vector.extract_strided_slice %34 {offsets = [0, 0], sizes = [16, 6], strides = [1, 1]} : vector<144x6xbf16> to vector<16x6xbf16>
    %cst_20 = arith.constant dense<0.000000e+00> : vector<16x128xf32>
    %39 = tpu.matmul %38, %37, %cst_20 {dimension_numbers = #tpu.dot_dimension_numbers<[1], [0], [0], [1], [0, 0, 1, 1], [], []>} : vector<16x6xbf16>, vector<6x128xbf16>, vector<16x128xf32> -> vector<16x128xf32>
    %c0_21 = arith.constant 0 : index
    %c0_22 = arith.constant 0 : index
    %40 = vector.load %arg15[%c0_21, %c0_22] : memref<16x128xf32, #tpu.memory_space<vmem>>, vector<16x128xf32>
    %41 = arith.addf %40, %39 : vector<16x128xf32>
    %c0_23 = arith.constant 0 : index
    %c0_24 = arith.constant 0 : index
    %42 = vector.load %arg15[%c0_23, %c0_24] : memref<16x128xf32, #tpu.memory_space<vmem>>, vector<16x128xf32>
    tpu.vector_store %arg15[%c0_23, %c0_24], %41 {strides = array<i32>} : memref<16x128xf32, #tpu.memory_space<vmem>>, vector<16x128xf32>,
    %43 = vector.extract_strided_slice %33 {offsets = [0, 128], sizes = [6, 128], strides = [1, 1]} : vector<6x512xbf16> to vector<6x128xbf16>
    %44 = vector.extract_strided_slice %34 {offsets = [16, 0], sizes = [16, 6], strides = [1, 1]} : vector<144x6xbf16> to vector<16x6xbf16>
    %cst_25 = arith.constant dense<0.000000e+00> : vector<16x128xf32>
    %45 = tpu.matmul %44, %43, %cst_25 {dimension_numbers = #tpu.dot_dimension_numbers<[1], [0], [0], [1], [0, 0, 1, 1], [], []>} : vector<16x6xbf16>, vector<6x128xbf16>, vector<16x128xf32> -> vector<16x128xf32>
    %c0_26 = arith.constant 0 : index
    %c0_27 = arith.constant 0 : index
    %46 = vector.load %arg15[%c0_26, %c0_27] : memref<16x128xf32, #tpu.memory_space<vmem>>, vector<16x128xf32>
    %47 = arith.addf %46, %45 : vector<16x128xf32>
    %c0_28 = arith.constant 0 : index
    %c0_29 = arith.constant 0 : index
    %48 = vector.load %arg15[%c0_28, %c0_29] : memref<16x128xf32, #tpu.memory_space<vmem>>, vector<16x128xf32>
    tpu.vector_store %arg15[%c0_28, %c0_29], %47 {strides = array<i32>} : memref<16x128xf32, #tpu.memory_space<vmem>>, vector<16x128xf32>,
    %49 = vector.extract_strided_slice %33 {offsets = [0, 0], sizes = [6, 128], strides = [1, 1]} : vector<6x512xbf16> to vector<6x128xbf16>
    %50 = vector.extract_strided_slice %34 {offsets = [32, 0], sizes = [16, 6], strides = [1, 1]} : vector<144x6xbf16> to vector<16x6xbf16>
    %cst_30 = arith.constant dense<0.000000e+00> : vector<16x128xf32>
    %51 = tpu.matmul %50, %49, %cst_30 {dimension_numbers = #tpu.dot_dimension_numbers<[1], [0], [0], [1], [0, 0, 1, 1], [], []>} : vector<16x6xbf16>, vector<6x128xbf16>, vector<16x128xf32> -> vector<16x128xf32>
    %c0_31 = arith.constant 0 : index
    %c0_32 = arith.constant 0 : index
    %52 = vector.load %arg15[%c0_31, %c0_32] : memref<16x128xf32, #tpu.memory_space<vmem>>, vector<16x127xf32>
    %53 = vector.extract_strided_slice %51 {offsets = [0, 1], sizes = [16, 127], strides = [1, 1]} : vector<16x128xf32> to vector<16x127xf32>
    %54 = arith.addf %52, %53 : vector<16x127xf32>
    %c0_33 = arith.constant 0 : index
    %c0_34 = arith.constant 0 : index
    %55 = vector.load %arg15[%c0_33, %c0_34] : memref<16x128xf32, #tpu.memory_space<vmem>>, vector<16x127xf32>
    tpu.vector_store %arg15[%c0_33, %c0_34], %54 {strides = array<i32>} : memref<16x128xf32, #tpu.memory_space<vmem>>, vector<16x127xf32>,
    %56 = vector.extract_strided_slice %33 {offsets = [0, 256], sizes = [6, 128], strides = [1, 1]} : vector<6x512xbf16> to vector<6x128xbf16>
    %57 = vector.extract_strided_slice %34 {offsets = [48, 0], sizes = [16, 6], strides = [1, 1]} : vector<144x6xbf16> to vector<16x6xbf16>
    %cst_35 = arith.constant dense<0.000000e+00> : vector<16x128xf32>
    %58 = tpu.matmul %57, %56, %cst_35 {dimension_numbers = #tpu.dot_dimension_numbers<[1], [0], [0], [1], [0, 0, 1, 1], [], []>} : vector<16x6xbf16>, vector<6x128xbf16>, vector<16x128xf32> -> vector<16x128xf32>
    %c0_36 = arith.constant 0 : index
    %c0_37 = arith.constant 0 : index
    %59 = vector.load %arg15[%c0_36, %c0_37] : memref<16x128xf32, #tpu.memory_space<vmem>>, vector<16x128xf32>
    %60 = arith.addf %59, %58 : vector<16x128xf32>
    %c0_38 = arith.constant 0 : index
    %c0_39 = arith.constant 0 : index
    %61 = vector.load %arg15[%c0_38, %c0_39] : memref<16x128xf32, #tpu.memory_space<vmem>>, vector<16x128xf32>
    tpu.vector_store %arg15[%c0_38, %c0_39], %60 {strides = array<i32>} : memref<16x128xf32, #tpu.memory_space<vmem>>, vector<16x128xf32>,
    %62 = vector.extract_strided_slice %33 {offsets = [0, 384], sizes = [6, 128], strides = [1, 1]} : vector<6x512xbf16> to vector<6x128xbf16>
    %63 = vector.extract_strided_slice %34 {offsets = [64, 0], sizes = [16, 6], strides = [1, 1]} : vector<144x6xbf16> to vector<16x6xbf16>
    %cst_40 = arith.constant dense<0.000000e+00> : vector<16x128xf32>
    %64 = tpu.matmul %63, %62, %cst_40 {dimension_numbers = #tpu.dot_dimension_numbers<[1], [0], [0], [1], [0, 0, 1, 1], [], []>} : vector<16x6xbf16>, vector<6x128xbf16>, vector<16x128xf32> -> vector<16x128xf32>
    %c0_41 = arith.constant 0 : index
    %c0_42 = arith.constant 0 : index
    %65 = vector.load %arg15[%c0_41, %c0_42] : memref<16x128xf32, #tpu.memory_space<vmem>>, vector<16x128xf32>
    %66 = arith.addf %65, %64 : vector<16x128xf32>
    %c0_43 = arith.constant 0 : index
    %c0_44 = arith.constant 0 : index
    %67 = vector.load %arg15[%c0_43, %c0_44] : memref<16x128xf32, #tpu.memory_space<vmem>>, vector<16x128xf32>
    tpu.vector_store %arg15[%c0_43, %c0_44], %66 {strides = array<i32>} : memref<16x128xf32, #tpu.memory_space<vmem>>, vector<16x128xf32>,
    %68 = vector.extract_strided_slice %33 {offsets = [0, 256], sizes = [6, 128], strides = [1, 1]} : vector<6x512xbf16> to vector<6x128xbf16>
    %69 = vector.extract_strided_slice %34 {offsets = [80, 0], sizes = [16, 6], strides = [1, 1]} : vector<144x6xbf16> to vector<16x6xbf16>
    %cst_45 = arith.constant dense<0.000000e+00> : vector<16x128xf32>
    %70 = tpu.matmul %69, %68, %cst_45 {dimension_numbers = #tpu.dot_dimension_numbers<[1], [0], [0], [1], [0, 0, 1, 1], [], []>} : vector<16x6xbf16>, vector<6x128xbf16>, vector<16x128xf32> -> vector<16x128xf32>
    %c0_46 = arith.constant 0 : index
    %c0_47 = arith.constant 0 : index
    %71 = vector.load %arg15[%c0_46, %c0_47] : memref<16x128xf32, #tpu.memory_space<vmem>>, vector<16x127xf32>
    %72 = vector.extract_strided_slice %70 {offsets = [0, 1], sizes = [16, 127], strides = [1, 1]} : vector<16x128xf32> to vector<16x127xf32>
    %73 = arith.addf %71, %72 : vector<16x127xf32>
    %c0_48 = arith.constant 0 : index
    %c0_49 = arith.constant 0 : index
    %74 = vector.load %arg15[%c0_48, %c0_49] : memref<16x128xf32, #tpu.memory_space<vmem>>, vector<16x127xf32>
    tpu.vector_store %arg15[%c0_48, %c0_49], %73 {strides = array<i32>} : memref<16x128xf32, #tpu.memory_space<vmem>>, vector<16x127xf32>,
    %75 = vector.extract_strided_slice %33 {offsets = [0, 0], sizes = [6, 128], strides = [1, 1]} : vector<6x512xbf16> to vector<6x128xbf16>
    %76 = vector.extract_strided_slice %34 {offsets = [96, 0], sizes = [16, 6], strides = [1, 1]} : vector<144x6xbf16> to vector<16x6xbf16>
    %cst_50 = arith.constant dense<0.000000e+00> : vector<16x128xf32>
    %77 = tpu.matmul %76, %75, %cst_50 {dimension_numbers = #tpu.dot_dimension_numbers<[1], [0], [0], [1], [0, 0, 1, 1], [], []>} : vector<16x6xbf16>, vector<6x128xbf16>, vector<16x128xf32> -> vector<16x128xf32>
    %c0_51 = arith.constant 0 : index
    %c0_52 = arith.constant 0 : index
    %78 = vector.load %arg15[%c0_51, %c0_52] : memref<16x128xf32, #tpu.memory_space<vmem>>, vector<16x120xf32>
    %79 = vector.extract_strided_slice %77 {offsets = [0, 8], sizes = [16, 120], strides = [1, 1]} : vector<16x128xf32> to vector<16x120xf32>
    %80 = arith.addf %78, %79 : vector<16x120xf32>
    %c0_53 = arith.constant 0 : index
    %c0_54 = arith.constant 0 : index
    %81 = vector.load %arg15[%c0_53, %c0_54] : memref<16x128xf32, #tpu.memory_space<vmem>>, vector<16x120xf32>
    tpu.vector_store %arg15[%c0_53, %c0_54], %80 {strides = array<i32>} : memref<16x128xf32, #tpu.memory_space<vmem>>, vector<16x120xf32>,
    %82 = vector.extract_strided_slice %33 {offsets = [0, 128], sizes = [6, 128], strides = [1, 1]} : vector<6x512xbf16> to vector<6x128xbf16>
    %83 = vector.extract_strided_slice %34 {offsets = [112, 0], sizes = [16, 6], strides = [1, 1]} : vector<144x6xbf16> to vector<16x6xbf16>
    %cst_55 = arith.constant dense<0.000000e+00> : vector<16x128xf32>
    %84 = tpu.matmul %83, %82, %cst_55 {dimension_numbers = #tpu.dot_dimension_numbers<[1], [0], [0], [1], [0, 0, 1, 1], [], []>} : vector<16x6xbf16>, vector<6x128xbf16>, vector<16x128xf32> -> vector<16x128xf32>
    %c0_56 = arith.constant 0 : index
    %c0_57 = arith.constant 0 : index
    %85 = vector.load %arg15[%c0_56, %c0_57] : memref<16x128xf32, #tpu.memory_space<vmem>>, vector<16x120xf32>
    %86 = vector.extract_strided_slice %84 {offsets = [0, 8], sizes = [16, 120], strides = [1, 1]} : vector<16x128xf32> to vector<16x120xf32>
    %87 = arith.addf %85, %86 : vector<16x120xf32>
    %c0_58 = arith.constant 0 : index
    %c0_59 = arith.constant 0 : index
    %88 = vector.load %arg15[%c0_58, %c0_59] : memref<16x128xf32, #tpu.memory_space<vmem>>, vector<16x120xf32>
    tpu.vector_store %arg15[%c0_58, %c0_59], %87 {strides = array<i32>} : memref<16x128xf32, #tpu.memory_space<vmem>>, vector<16x120xf32>,
    %89 = vector.extract_strided_slice %33 {offsets = [0, 0], sizes = [6, 128], strides = [1, 1]} : vector<6x512xbf16> to vector<6x128xbf16>
    %90 = vector.extract_strided_slice %34 {offsets = [128, 0], sizes = [16, 6], strides = [1, 1]} : vector<144x6xbf16> to vector<16x6xbf16>
    %cst_60 = arith.constant dense<0.000000e+00> : vector<16x128xf32>
    %91 = tpu.matmul %90, %89, %cst_60 {dimension_numbers = #tpu.dot_dimension_numbers<[1], [0], [0], [1], [0, 0, 1, 1], [], []>} : vector<16x6xbf16>, vector<6x128xbf16>, vector<16x128xf32> -> vector<16x128xf32>
    %c0_61 = arith.constant 0 : index
    %c0_62 = arith.constant 0 : index
    %92 = vector.load %arg15[%c0_61, %c0_62] : memref<16x128xf32, #tpu.memory_space<vmem>>, vector<16x119xf32>
    %93 = vector.extract_strided_slice %91 {offsets = [0, 9], sizes = [16, 119], strides = [1, 1]} : vector<16x128xf32> to vector<16x119xf32>
    %94 = arith.addf %92, %93 : vector<16x119xf32>
    %c0_63 = arith.constant 0 : index
    %c0_64 = arith.constant 0 : index
    %95 = vector.load %arg15[%c0_63, %c0_64] : memref<16x128xf32, #tpu.memory_space<vmem>>, vector<16x119xf32>
    tpu.vector_store %arg15[%c0_63, %c0_64], %94 {strides = array<i32>} : memref<16x128xf32, #tpu.memory_space<vmem>>, vector<16x119xf32>,
    %c0_65 = arith.constant 0 : index
    %c0_66 = arith.constant 0 : index
    %96 = vector.load %arg15[%c0_65, %c0_66] : memref<16x128xf32, #tpu.memory_space<vmem>>, vector<16x128xf32>
    %c0_67 = arith.constant 0 : index
    %c0_68 = arith.constant 0 : index
    %97 = vector.load %arg2[%c0_67, %c0_68] : memref<1x128xf32, #tpu.memory_space<vmem>>, vector<1x128xf32>
    %98 = vector.broadcast %97 : vector<1x128xf32> to vector<16x128xf32>
    %99 = arith.mulf %96, %98 : vector<16x128xf32>
    %cst_69 = arith.constant dense<0.000000e+00> : vector<16xf32>
    %100 = vector.multi_reduction <add>, %99, %cst_69 [1] : vector<16x128xf32> to vector<16xf32>
    %101 = vector.shape_cast %100 : vector<16xf32> to vector<16x1xf32>
    %cst_70 = arith.constant 9.800000e+01 : f32
    %102 = vector.broadcast %cst_70 : f32 to vector<16x1xf32>
    %103 = arith.divf %101, %102 : vector<16x1xf32>
    %104 = arith.mulf %99, %99 : vector<16x128xf32>
    %cst_71 = arith.constant dense<0.000000e+00> : vector<16xf32>
    %105 = vector.multi_reduction <add>, %104, %cst_71 [1] : vector<16x128xf32> to vector<16xf32>
    %106 = vector.shape_cast %105 : vector<16xf32> to vector<16x1xf32>
    %cst_72 = arith.constant 9.800000e+01 : f32
    %107 = vector.broadcast %cst_72 : f32 to vector<16x1xf32>
    %108 = arith.divf %106, %107 : vector<16x1xf32>
    %109 = arith.mulf %103, %103 : vector<16x1xf32>
    %110 = arith.subf %108, %109 : vector<16x1xf32>
    %c0_73 = arith.constant 0 : index
    %c0_74 = arith.constant 0 : index
    %111 = vector.load %arg7[%c0_73, %c0_74] : memref<16x1xf32, #tpu.memory_space<vmem>>, vector<16x1xf32>
    %cst_75 = arith.constant 9.99999974E-6 : f32
    %112 = vector.broadcast %cst_75 : f32 to vector<16x1xf32>
    %113 = arith.addf %110, %112 : vector<16x1xf32>
    %114 = math.rsqrt %113 : vector<16x1xf32>
    %115 = arith.mulf %111, %114 : vector<16x1xf32>
    %c0_76 = arith.constant 0 : index
    %c0_77 = arith.constant 0 : index
    %116 = vector.load %arg8[%c0_76, %c0_77] : memref<16x1xf32, #tpu.memory_space<vmem>>, vector<16x1xf32>
    %117 = arith.mulf %103, %115 : vector<16x1xf32>
    %118 = arith.subf %116, %117 : vector<16x1xf32>
    %119 = vector.broadcast %115 : vector<16x1xf32> to vector<16x128xf32>
    %120 = arith.mulf %96, %119 : vector<16x128xf32>
    %121 = vector.broadcast %118 : vector<16x1xf32> to vector<16x128xf32>
    %122 = arith.addf %120, %121 : vector<16x128xf32>
    %cst_78 = arith.constant 0.000000e+00 : f32
    %123 = vector.broadcast %cst_78 : f32 to vector<16x128xf32>
    %124 = arith.maximumf %122, %123 : vector<16x128xf32>
    %125 = vector.extract_strided_slice %124 {offsets = [0, 0], sizes = [1, 64], strides = [1, 1]} : vector<16x128xf32> to vector<1x64xf32>
    %c0_79 = arith.constant 0 : index
    %c0_80 = arith.constant 0 : index
    %126 = vector.load %arg16[%c0_79, %c0_80] : memref<2x1024xf32, #tpu.memory_space<vmem>>, vector<1x64xf32>
    tpu.vector_store %arg16[%c0_79, %c0_80], %125 {strides = array<i32>} : memref<2x1024xf32, #tpu.memory_space<vmem>>, vector<1x64xf32>,
    %127 = vector.extract_strided_slice %124 {offsets = [1, 0], sizes = [1, 64], strides = [1, 1]} : vector<16x128xf32> to vector<1x64xf32>
    %c0_81 = arith.constant 0 : index
    %c64 = arith.constant 64 : index
    %128 = vector.load %arg16[%c0_81, %c64] : memref<2x1024xf32, #tpu.memory_space<vmem>>, vector<1x64xf32>
    tpu.vector_store %arg16[%c0_81, %c64], %127 {strides = array<i32>} : memref<2x1024xf32, #tpu.memory_space<vmem>>, vector<1x64xf32>,
    %129 = vector.extract_strided_slice %124 {offsets = [2, 0], sizes = [1, 64], strides = [1, 1]} : vector<16x128xf32> to vector<1x64xf32>
    %c0_82 = arith.constant 0 : index
    %c128 = arith.constant 128 : index
    %130 = vector.load %arg16[%c0_82, %c128] : memref<2x1024xf32, #tpu.memory_space<vmem>>, vector<1x64xf32>
    tpu.vector_store %arg16[%c0_82, %c128], %129 {strides = array<i32>} : memref<2x1024xf32, #tpu.memory_space<vmem>>, vector<1x64xf32>,
    %131 = vector.extract_strided_slice %124 {offsets = [3, 0], sizes = [1, 64], strides = [1, 1]} : vector<16x128xf32> to vector<1x64xf32>
    %c0_83 = arith.constant 0 : index
    %c192 = arith.constant 192 : index
    %132 = vector.load %arg16[%c0_83, %c192] : memref<2x1024xf32, #tpu.memory_space<vmem>>, vector<1x64xf32>
    tpu.vector_store %arg16[%c0_83, %c192], %131 {strides = array<i32>} : memref<2x1024xf32, #tpu.memory_space<vmem>>, vector<1x64xf32>,
    %133 = vector.extract_strided_slice %124 {offsets = [4, 0], sizes = [1, 64], strides = [1, 1]} : vector<16x128xf32> to vector<1x64xf32>
    %c0_84 = arith.constant 0 : index
    %c256 = arith.constant 256 : index
    %134 = vector.load %arg16[%c0_84, %c256] : memref<2x1024xf32, #tpu.memory_space<vmem>>, vector<1x64xf32>
    tpu.vector_store %arg16[%c0_84, %c256], %133 {strides = array<i32>} : memref<2x1024xf32, #tpu.memory_space<vmem>>, vector<1x64xf32>,
    %135 = vector.extract_strided_slice %124 {offsets = [5, 0], sizes = [1, 64], strides = [1, 1]} : vector<16x128xf32> to vector<1x64xf32>
    %c0_85 = arith.constant 0 : index
    %c320 = arith.constant 320 : index
    %136 = vector.load %arg16[%c0_85, %c320] : memref<2x1024xf32, #tpu.memory_space<vmem>>, vector<1x64xf32>
    tpu.vector_store %arg16[%c0_85, %c320], %135 {strides = array<i32>} : memref<2x1024xf32, #tpu.memory_space<vmem>>, vector<1x64xf32>,
    %137 = vector.extract_strided_slice %124 {offsets = [6, 0], sizes = [1, 64], strides = [1, 1]} : vector<16x128xf32> to vector<1x64xf32>
    %c0_86 = arith.constant 0 : index
    %c384 = arith.constant 384 : index
    %138 = vector.load %arg16[%c0_86, %c384] : memref<2x1024xf32, #tpu.memory_space<vmem>>, vector<1x64xf32>
    tpu.vector_store %arg16[%c0_86, %c384], %137 {strides = array<i32>} : memref<2x1024xf32, #tpu.memory_space<vmem>>, vector<1x64xf32>,
    %139 = vector.extract_strided_slice %124 {offsets = [7, 0], sizes = [1, 64], strides = [1, 1]} : vector<16x128xf32> to vector<1x64xf32>
    %c0_87 = arith.constant 0 : index
    %c448 = arith.constant 448 : index
    %140 = vector.load %arg16[%c0_87, %c448] : memref<2x1024xf32, #tpu.memory_space<vmem>>, vector<1x64xf32>
    tpu.vector_store %arg16[%c0_87, %c448], %139 {strides = array<i32>} : memref<2x1024xf32, #tpu.memory_space<vmem>>, vector<1x64xf32>,
    %141 = vector.extract_strided_slice %124 {offsets = [8, 0], sizes = [1, 64], strides = [1, 1]} : vector<16x128xf32> to vector<1x64xf32>
    %c0_88 = arith.constant 0 : index
    %c512 = arith.constant 512 : index
    %142 = vector.load %arg16[%c0_88, %c512] : memref<2x1024xf32, #tpu.memory_space<vmem>>, vector<1x64xf32>
    tpu.vector_store %arg16[%c0_88, %c512], %141 {strides = array<i32>} : memref<2x1024xf32, #tpu.memory_space<vmem>>, vector<1x64xf32>,
    %143 = vector.extract_strided_slice %124 {offsets = [9, 0], sizes = [1, 64], strides = [1, 1]} : vector<16x128xf32> to vector<1x64xf32>
    %c0_89 = arith.constant 0 : index
    %c576 = arith.constant 576 : index
    %144 = vector.load %arg16[%c0_89, %c576] : memref<2x1024xf32, #tpu.memory_space<vmem>>, vector<1x64xf32>
    tpu.vector_store %arg16[%c0_89, %c576], %143 {strides = array<i32>} : memref<2x1024xf32, #tpu.memory_space<vmem>>, vector<1x64xf32>,
    %145 = vector.extract_strided_slice %124 {offsets = [10, 0], sizes = [1, 64], strides = [1, 1]} : vector<16x128xf32> to vector<1x64xf32>
    %c0_90 = arith.constant 0 : index
    %c640 = arith.constant 640 : index
    %146 = vector.load %arg16[%c0_90, %c640] : memref<2x1024xf32, #tpu.memory_space<vmem>>, vector<1x64xf32>
    tpu.vector_store %arg16[%c0_90, %c640], %145 {strides = array<i32>} : memref<2x1024xf32, #tpu.memory_space<vmem>>, vector<1x64xf32>,
    %147 = vector.extract_strided_slice %124 {offsets = [11, 0], sizes = [1, 64], strides = [1, 1]} : vector<16x128xf32> to vector<1x64xf32>
    %c0_91 = arith.constant 0 : index
    %c704 = arith.constant 704 : index
    %148 = vector.load %arg16[%c0_91, %c704] : memref<2x1024xf32, #tpu.memory_space<vmem>>, vector<1x64xf32>
    tpu.vector_store %arg16[%c0_91, %c704], %147 {strides = array<i32>} : memref<2x1024xf32, #tpu.memory_space<vmem>>, vector<1x64xf32>,
    %149 = vector.extract_strided_slice %124 {offsets = [12, 0], sizes = [1, 64], strides = [1, 1]} : vector<16x128xf32> to vector<1x64xf32>
    %c0_92 = arith.constant 0 : index
    %c768 = arith.constant 768 : index
    %150 = vector.load %arg16[%c0_92, %c768] : memref<2x1024xf32, #tpu.memory_space<vmem>>, vector<1x64xf32>
    tpu.vector_store %arg16[%c0_92, %c768], %149 {strides = array<i32>} : memref<2x1024xf32, #tpu.memory_space<vmem>>, vector<1x64xf32>,
    %151 = vector.extract_strided_slice %124 {offsets = [13, 0], sizes = [1, 64], strides = [1, 1]} : vector<16x128xf32> to vector<1x64xf32>
    %c0_93 = arith.constant 0 : index
    %c832 = arith.constant 832 : index
    %152 = vector.load %arg16[%c0_93, %c832] : memref<2x1024xf32, #tpu.memory_space<vmem>>, vector<1x64xf32>
    tpu.vector_store %arg16[%c0_93, %c832], %151 {strides = array<i32>} : memref<2x1024xf32, #tpu.memory_space<vmem>>, vector<1x64xf32>,
    %153 = vector.extract_strided_slice %124 {offsets = [14, 0], sizes = [1, 64], strides = [1, 1]} : vector<16x128xf32> to vector<1x64xf32>
    %c0_94 = arith.constant 0 : index
    %c896 = arith.constant 896 : index
    %154 = vector.load %arg16[%c0_94, %c896] : memref<2x1024xf32, #tpu.memory_space<vmem>>, vector<1x64xf32>
    tpu.vector_store %arg16[%c0_94, %c896], %153 {strides = array<i32>} : memref<2x1024xf32, #tpu.memory_space<vmem>>, vector<1x64xf32>,
    %155 = vector.extract_strided_slice %124 {offsets = [15, 0], sizes = [1, 64], strides = [1, 1]} : vector<16x128xf32> to vector<1x64xf32>
    %c0_95 = arith.constant 0 : index
    %c960 = arith.constant 960 : index
    %156 = vector.load %arg16[%c0_95, %c960] : memref<2x1024xf32, #tpu.memory_space<vmem>>, vector<1x64xf32>
    tpu.vector_store %arg16[%c0_95, %c960], %155 {strides = array<i32>} : memref<2x1024xf32, #tpu.memory_space<vmem>>, vector<1x64xf32>,
    %157 = vector.extract_strided_slice %124 {offsets = [0, 64], sizes = [1, 64], strides = [1, 1]} : vector<16x128xf32> to vector<1x64xf32>
    %c1 = arith.constant 1 : index
    %c0_96 = arith.constant 0 : index
    %158 = vector.load %arg16[%c1, %c0_96] : memref<2x1024xf32, #tpu.memory_space<vmem>>, vector<1x64xf32>
    tpu.vector_store %arg16[%c1, %c0_96], %157 {strides = array<i32>} : memref<2x1024xf32, #tpu.memory_space<vmem>>, vector<1x64xf32>,
    %159 = vector.extract_strided_slice %124 {offsets = [1, 64], sizes = [1, 64], strides = [1, 1]} : vector<16x128xf32> to vector<1x64xf32>
    %c1_97 = arith.constant 1 : index
    %c64_98 = arith.constant 64 : index
    %160 = vector.load %arg16[%c1_97, %c64_98] : memref<2x1024xf32, #tpu.memory_space<vmem>>, vector<1x64xf32>
    tpu.vector_store %arg16[%c1_97, %c64_98], %159 {strides = array<i32>} : memref<2x1024xf32, #tpu.memory_space<vmem>>, vector<1x64xf32>,
    %161 = vector.extract_strided_slice %124 {offsets = [2, 64], sizes = [1, 64], strides = [1, 1]} : vector<16x128xf32> to vector<1x64xf32>
    %c1_99 = arith.constant 1 : index
    %c128_100 = arith.constant 128 : index
    %162 = vector.load %arg16[%c1_99, %c128_100] : memref<2x1024xf32, #tpu.memory_space<vmem>>, vector<1x64xf32>
    tpu.vector_store %arg16[%c1_99, %c128_100], %161 {strides = array<i32>} : memref<2x1024xf32, #tpu.memory_space<vmem>>, vector<1x64xf32>,
    %163 = vector.extract_strided_slice %124 {offsets = [3, 64], sizes = [1, 64], strides = [1, 1]} : vector<16x128xf32> to vector<1x64xf32>
    %c1_101 = arith.constant 1 : index
    %c192_102 = arith.constant 192 : index
    %164 = vector.load %arg16[%c1_101, %c192_102] : memref<2x1024xf32, #tpu.memory_space<vmem>>, vector<1x64xf32>
    tpu.vector_store %arg16[%c1_101, %c192_102], %163 {strides = array<i32>} : memref<2x1024xf32, #tpu.memory_space<vmem>>, vector<1x64xf32>,
    %165 = vector.extract_strided_slice %124 {offsets = [4, 64], sizes = [1, 64], strides = [1, 1]} : vector<16x128xf32> to vector<1x64xf32>
    %c1_103 = arith.constant 1 : index
    %c256_104 = arith.constant 256 : index
    %166 = vector.load %arg16[%c1_103, %c256_104] : memref<2x1024xf32, #tpu.memory_space<vmem>>, vector<1x64xf32>
    tpu.vector_store %arg16[%c1_103, %c256_104], %165 {strides = array<i32>} : memref<2x1024xf32, #tpu.memory_space<vmem>>, vector<1x64xf32>,
    %167 = vector.extract_strided_slice %124 {offsets = [5, 64], sizes = [1, 64], strides = [1, 1]} : vector<16x128xf32> to vector<1x64xf32>
    %c1_105 = arith.constant 1 : index
    %c320_106 = arith.constant 320 : index
    %168 = vector.load %arg16[%c1_105, %c320_106] : memref<2x1024xf32, #tpu.memory_space<vmem>>, vector<1x64xf32>
    tpu.vector_store %arg16[%c1_105, %c320_106], %167 {strides = array<i32>} : memref<2x1024xf32, #tpu.memory_space<vmem>>, vector<1x64xf32>,
    %169 = vector.extract_strided_slice %124 {offsets = [6, 64], sizes = [1, 64], strides = [1, 1]} : vector<16x128xf32> to vector<1x64xf32>
    %c1_107 = arith.constant 1 : index
    %c384_108 = arith.constant 384 : index
    %170 = vector.load %arg16[%c1_107, %c384_108] : memref<2x1024xf32, #tpu.memory_space<vmem>>, vector<1x64xf32>
    tpu.vector_store %arg16[%c1_107, %c384_108], %169 {strides = array<i32>} : memref<2x1024xf32, #tpu.memory_space<vmem>>, vector<1x64xf32>,
    %171 = vector.extract_strided_slice %124 {offsets = [7, 64], sizes = [1, 64], strides = [1, 1]} : vector<16x128xf32> to vector<1x64xf32>
    %c1_109 = arith.constant 1 : index
    %c448_110 = arith.constant 448 : index
    %172 = vector.load %arg16[%c1_109, %c448_110] : memref<2x1024xf32, #tpu.memory_space<vmem>>, vector<1x64xf32>
    tpu.vector_store %arg16[%c1_109, %c448_110], %171 {strides = array<i32>} : memref<2x1024xf32, #tpu.memory_space<vmem>>, vector<1x64xf32>,
    %173 = vector.extract_strided_slice %124 {offsets = [8, 64], sizes = [1, 64], strides = [1, 1]} : vector<16x128xf32> to vector<1x64xf32>
    %c1_111 = arith.constant 1 : index
    %c512_112 = arith.constant 512 : index
    %174 = vector.load %arg16[%c1_111, %c512_112] : memref<2x1024xf32, #tpu.memory_space<vmem>>, vector<1x64xf32>
    tpu.vector_store %arg16[%c1_111, %c512_112], %173 {strides = array<i32>} : memref<2x1024xf32, #tpu.memory_space<vmem>>, vector<1x64xf32>,
    %175 = vector.extract_strided_slice %124 {offsets = [9, 64], sizes = [1, 64], strides = [1, 1]} : vector<16x128xf32> to vector<1x64xf32>
    %c1_113 = arith.constant 1 : index
    %c576_114 = arith.constant 576 : index
    %176 = vector.load %arg16[%c1_113, %c576_114] : memref<2x1024xf32, #tpu.memory_space<vmem>>, vector<1x64xf32>
    tpu.vector_store %arg16[%c1_113, %c576_114], %175 {strides = array<i32>} : memref<2x1024xf32, #tpu.memory_space<vmem>>, vector<1x64xf32>,
    %177 = vector.extract_strided_slice %124 {offsets = [10, 64], sizes = [1, 64], strides = [1, 1]} : vector<16x128xf32> to vector<1x64xf32>
    %c1_115 = arith.constant 1 : index
    %c640_116 = arith.constant 640 : index
    %178 = vector.load %arg16[%c1_115, %c640_116] : memref<2x1024xf32, #tpu.memory_space<vmem>>, vector<1x64xf32>
    tpu.vector_store %arg16[%c1_115, %c640_116], %177 {strides = array<i32>} : memref<2x1024xf32, #tpu.memory_space<vmem>>, vector<1x64xf32>,
    %179 = vector.extract_strided_slice %124 {offsets = [11, 64], sizes = [1, 64], strides = [1, 1]} : vector<16x128xf32> to vector<1x64xf32>
    %c1_117 = arith.constant 1 : index
    %c704_118 = arith.constant 704 : index
    %180 = vector.load %arg16[%c1_117, %c704_118] : memref<2x1024xf32, #tpu.memory_space<vmem>>, vector<1x64xf32>
    tpu.vector_store %arg16[%c1_117, %c704_118], %179 {strides = array<i32>} : memref<2x1024xf32, #tpu.memory_space<vmem>>, vector<1x64xf32>,
    %181 = vector.extract_strided_slice %124 {offsets = [12, 64], sizes = [1, 64], strides = [1, 1]} : vector<16x128xf32> to vector<1x64xf32>
    %c1_119 = arith.constant 1 : index
    %c768_120 = arith.constant 768 : index
    %182 = vector.load %arg16[%c1_119, %c768_120] : memref<2x1024xf32, #tpu.memory_space<vmem>>, vector<1x64xf32>
    tpu.vector_store %arg16[%c1_119, %c768_120], %181 {strides = array<i32>} : memref<2x1024xf32, #tpu.memory_space<vmem>>, vector<1x64xf32>,
    %183 = vector.extract_strided_slice %124 {offsets = [13, 64], sizes = [1, 64], strides = [1, 1]} : vector<16x128xf32> to vector<1x64xf32>
    %c1_121 = arith.constant 1 : index
    %c832_122 = arith.constant 832 : index
    %184 = vector.load %arg16[%c1_121, %c832_122] : memref<2x1024xf32, #tpu.memory_space<vmem>>, vector<1x64xf32>
    tpu.vector_store %arg16[%c1_121, %c832_122], %183 {strides = array<i32>} : memref<2x1024xf32, #tpu.memory_space<vmem>>, vector<1x64xf32>,
    %185 = vector.extract_strided_slice %124 {offsets = [14, 64], sizes = [1, 64], strides = [1, 1]} : vector<16x128xf32> to vector<1x64xf32>
    %c1_123 = arith.constant 1 : index
    %c896_124 = arith.constant 896 : index
    %186 = vector.load %arg16[%c1_123, %c896_124] : memref<2x1024xf32, #tpu.memory_space<vmem>>, vector<1x64xf32>
    tpu.vector_store %arg16[%c1_123, %c896_124], %185 {strides = array<i32>} : memref<2x1024xf32, #tpu.memory_space<vmem>>, vector<1x64xf32>,
    %187 = vector.extract_strided_slice %124 {offsets = [15, 64], sizes = [1, 64], strides = [1, 1]} : vector<16x128xf32> to vector<1x64xf32>
    %c1_125 = arith.constant 1 : index
    %c960_126 = arith.constant 960 : index
    %188 = vector.load %arg16[%c1_125, %c960_126] : memref<2x1024xf32, #tpu.memory_space<vmem>>, vector<1x64xf32>
    tpu.vector_store %arg16[%c1_125, %c960_126], %187 {strides = array<i32>} : memref<2x1024xf32, #tpu.memory_space<vmem>>, vector<1x64xf32>,
    %c0_127 = arith.constant 0 : index
    %c0_128 = arith.constant 0 : index
    %189 = vector.load %arg16[%c0_127, %c0_128] : memref<2x1024xf32, #tpu.memory_space<vmem>>, vector<2x1024xf32>
    %190 = arith.truncf %189 : vector<2x1024xf32> to vector<2x1024xbf16>
    %c0_129 = arith.constant 0 : index
    %c0_130 = arith.constant 0 : index
    %191 = vector.load %arg9[%c0_129, %c0_130] : memref<1024x32xbf16, #tpu.memory_space<vmem>>, vector<1024x32xbf16>
    %cst_131 = arith.constant dense<0.000000e+00> : vector<2x32xf32>
    %192 = tpu.matmul %190, %191, %cst_131 {dimension_numbers = #tpu.dot_dimension_numbers<[1], [0], [0], [1], [0, 0, 1, 1], [], []>} : vector<2x1024xbf16>, vector<1024x32xbf16>, vector<2x32xf32> -> vector<2x32xf32>
    %c0_132 = arith.constant 0 : index
    %c0_133 = arith.constant 0 : index
    %193 = vector.load %arg10[%c0_132, %c0_133] : memref<1x32xf32, #tpu.memory_space<vmem>>, vector<1x32xf32>
    %194 = vector.broadcast %193 : vector<1x32xf32> to vector<2x32xf32>
    %195 = arith.addf %192, %194 : vector<2x32xf32>
    %196 = arith.truncf %195 : vector<2x32xf32> to vector<2x32xbf16>
    %c0_134 = arith.constant 0 : index
    %c0_135 = arith.constant 0 : index
    %197 = vector.load %arg11[%c0_134, %c0_135] : memref<32x10xbf16, #tpu.memory_space<vmem>>, vector<32x10xbf16>
    %cst_136 = arith.constant dense<0.000000e+00> : vector<2x10xf32>
    %198 = tpu.matmul %196, %197, %cst_136 {dimension_numbers = #tpu.dot_dimension_numbers<[1], [0], [0], [1], [0, 0, 1, 1], [], []>} : vector<2x32xbf16>, vector<32x10xbf16>, vector<2x10xf32> -> vector<2x10xf32>
    %c0_137 = arith.constant 0 : index
    %c0_138 = arith.constant 0 : index
    %199 = vector.load %arg12[%c0_137, %c0_138] : memref<1x10xf32, #tpu.memory_space<vmem>>, vector<1x10xf32>
    %200 = vector.broadcast %199 : vector<1x10xf32> to vector<2x10xf32>
    %201 = arith.addf %198, %200 : vector<2x10xf32>
    %c0_139 = arith.constant 0 : index
    %c0_140 = arith.constant 0 : index
    %202 = vector.load %arg14[%c0_139, %c0_140] : memref<2x10xf32, #tpu.memory_space<vmem>>, vector<2x10xf32>
    tpu.vector_store %arg14[%c0_139, %c0_140], %201 {strides = array<i32>} : memref<2x10xf32, #tpu.memory_space<vmem>>, vector<2x10xf32>,
    %cst_141 = arith.constant dense<0xFF800000> : vector<2xf32>
    %203 = vector.multi_reduction <maximumf>, %201, %cst_141 [1] : vector<2x10xf32> to vector<2xf32>
    %204 = vector.shape_cast %203 : vector<2xf32> to vector<2x1xf32>
    %205 = vector.broadcast %204 : vector<2x1xf32> to vector<2x10xf32>
    %206 = arith.subf %201, %205 : vector<2x10xf32>
    %207 = math.exp %206 : vector<2x10xf32>
    %cst_142 = arith.constant dense<0.000000e+00> : vector<2xf32>
    %208 = vector.multi_reduction <add>, %207, %cst_142 [1] : vector<2x10xf32> to vector<2xf32>
    %209 = vector.shape_cast %208 : vector<2xf32> to vector<2x1xf32>
    %210 = math.log %209 : vector<2x1xf32>
    %211 = arith.addf %210, %204 : vector<2x1xf32>
    %212 = vector.broadcast %211 : vector<2x1xf32> to vector<2x10xf32>
    %213 = arith.subf %201, %212 : vector<2x10xf32>
    %c0_143 = arith.constant 0 : index
    %c0_144 = arith.constant 0 : index
    %214 = vector.load %arg13[%c0_143, %c0_144] : memref<2x10xf32, #tpu.memory_space<vmem>>, vector<2x10xf32>
    tpu.vector_store %arg13[%c0_143, %c0_144], %213 {strides = array<i32>} : memref<2x10xf32, #tpu.memory_space<vmem>>, vector<2x10xf32>,
    return
  }
}

</mosaic_0001>

<llo_original>
// kernel: net_forward.1
$region0: #{net_forward.1}
  #allocation0 [shape = 'u32[]', space=smem, size = 0x4, offset = 0x4, fixed_abs, tag = 'smem constant byte address 0x4 - core index']
  #allocation1 [shape = 'u32[72,128]{1,0:T(1,128)}', space=vmem, size = 0x9000, scoped, tag = 'internal scratch']
  #allocation2 [shape = 'f32[16,128]{1,0:T(8,128)}', space=vmem, size = 0x2000, scoped, tag = 'scratch operand']
  #allocation3 [shape = 'f32[2,1024]{1,0:T(2,128)}', space=vmem, size = 0x2000, scoped, tag = 'scratch operand']
  %s0 = inlined_call_operand.vmem [shape: bf16[9,512], index: 0, kind: input, shape index: {}]
  %s1 = inlined_call_operand.vmem [shape: f32[1,512], index: 1, kind: input, shape index: {}]
  %s2 = inlined_call_operand.vmem [shape: f32[1,128], index: 2, kind: input, shape index: {}]
  %s3 = inlined_call_operand.vmem [shape: bf16[6,9], index: 3, kind: input, shape index: {}]
  %s4 = inlined_call_operand.vmem [shape: f32[6,1], index: 4, kind: input, shape index: {}]
  %s5 = inlined_call_operand.vmem [shape: f32[6,1], index: 5, kind: input, shape index: {}]
  %s6 = inlined_call_operand.vmem [shape: bf16[144,6], index: 6, kind: input, shape index: {}]
  %s7 = inlined_call_operand.vmem [shape: f32[16,1], index: 7, kind: input, shape index: {}]
  %s8 = inlined_call_operand.vmem [shape: f32[16,1], index: 8, kind: input, shape index: {}]
  %s9 = inlined_call_operand.vmem [shape: bf16[1024,32], index: 9, kind: input, shape index: {}]
  %s10 = inlined_call_operand.vmem [shape: f32[1,32], index: 10, kind: input, shape index: {}]
  %s11 = inlined_call_operand.vmem [shape: bf16[32,10], index: 11, kind: input, shape index: {}]
  %s12 = inlined_call_operand.vmem [shape: f32[1,10], index: 12, kind: input, shape index: {}]
  %s13 = inlined_call_operand.hbm [shape: f32[2,10], index: 13, kind: output, shape index: {0}]
  %s14 = inlined_call_operand.hbm [shape: f32[2,10], index: 14, kind: output, shape index: {1}]
  %15 = xla_tuple %s13, %s14
  %s16 = sld [smem:[#allocation0]]
  $region70: #{net_forward.1} parent=0
    _
  %s18 = ssub.s32 1, %s16
  %s19 = scalar_select 0, %s18, %s16
  $region1: #{net_forward.1} parent=0
    #allocation4 [shape = 'u8[1024]{0}', space=vmem, size = 0x400, scoped, tag = 'output window, operand 0, single buffered']
    #allocation5 [shape = 's32[1]{0}', space=sflag, size = 0x4, scoped, tag = 'scoped memory for net_forward.1']
    #allocation6 [shape = 'u8[1024]{0}', space=vmem, size = 0x400, scoped, tag = 'output window, operand 1, single buffered']
    #allocation7 [shape = 's32[1]{0}', space=sflag, size = 0x4, scoped, tag = 'scoped memory for net_forward.1']
    %20 = vsyncpa [#allocation5], 0
    %21 = vsyncpa [#allocation7], 0
    // Predicated region
    $region2: #{net_forward.1} parent=1 // pred_check
      _
    $region3: #{net_forward.1} parent=1 // pred_check_branch
      %23 = sbr.rel (0) target = $region5
    $region4: #{net_forward.1} parent=1 // pred_region
      _
    $region5: #{net_forward.1} parent=1 // pred_fallthru
      _
    // Predicated region
    $region6: #{net_forward.1} parent=1 // pred_check
      _
    $region7: #{net_forward.1} parent=1 // pred_check_branch
      %25 = sbr.rel (0) target = $region9
    $region8: #{net_forward.1} parent=1 // pred_region
      _
    $region9: #{net_forward.1} parent=1 // pred_fallthru
      _
    // Predicated region
    $region10: #{net_forward.1} parent=1 // pred_check
      _
    $region11: #{net_forward.1} parent=1 // pred_check_branch
      %27 = sbr.rel (0) target = $region13
    $region12: #{net_forward.1} parent=1 // pred_region
      _
    $region13: #{net_forward.1} parent=1 // pred_fallthru
      _
    // Predicated region
    $region14: #{net_forward.1} parent=1 // pred_check
      _
    $region15: #{net_forward.1} parent=1 // pred_check_branch
      %29 = sbr.rel (0) target = $region17
    $region16: #{net_forward.1} parent=1 // pred_region
      _
    $region17: #{net_forward.1} parent=1 // pred_fallthru
      _
    // Predicated region
    $region18: #{net_forward.1} parent=1 // pred_check
      _
    $region19: #{net_forward.1} parent=1 // pred_check_branch
      %31 = sbr.rel (0) target = $region21
    $region20: #{net_forward.1} parent=1 // pred_region
      _
    $region21: #{net_forward.1} parent=1 // pred_fallthru
      _
    // Predicated region
    $region22: #{net_forward.1} parent=1 // pred_check
      _
    $region23: #{net_forward.1} parent=1 // pred_check_branch
      %33 = sbr.rel (0) target = $region25
    $region24: #{net_forward.1} parent=1 // pred_region
      _
    $region25: #{net_forward.1} parent=1 // pred_fallthru
      _
    // Predicated region
    $region26: #{net_forward.1} parent=1 // pred_check
      _
    $region27: #{net_forward.1} parent=1 // pred_check_branch
      %35 = sbr.rel (0) target = $region29
    $region28: #{net_forward.1} parent=1 // pred_region
      _
    $region29: #{net_forward.1} parent=1 // pred_fallthru
      _
    // Predicated region
    $region30: #{net_forward.1} parent=1 // pred_check
      _
    $region31: #{net_forward.1} parent=1 // pred_check_branch
      %37 = sbr.rel (0) target = $region33
    $region32: #{net_forward.1} parent=1 // pred_region
      _
    $region33: #{net_forward.1} parent=1 // pred_fallthru
      _
    // Predicated region
    $region34: #{net_forward.1} parent=1 // pred_check
      _
    $region35: #{net_forward.1} parent=1 // pred_check_branch
      %39 = sbr.rel (0) target = $region37
    $region36: #{net_forward.1} parent=1 // pred_region
      _
    $region37: #{net_forward.1} parent=1 // pred_fallthru
      _
    // Predicated region
    $region38: #{net_forward.1} parent=1 // pred_check
      _
    $region39: #{net_forward.1} parent=1 // pred_check_branch
      %41 = sbr.rel (0) target = $region41
    $region40: #{net_forward.1} parent=1 // pred_region
      _
    $region41: #{net_forward.1} parent=1 // pred_fallthru
      _
    // Predicated region
    $region42: #{net_forward.1} parent=1 // pred_check
      _
    $region43: #{net_forward.1} parent=1 // pred_check_branch
      %43 = sbr.rel (0) target = $region45
    $region44: #{net_forward.1} parent=1 // pred_region
      _
    $region45: #{net_forward.1} parent=1 // pred_fallthru
      _
    // Predicated region
    $region46: #{net_forward.1} parent=1 // pred_check
      _
    $region47: #{net_forward.1} parent=1 // pred_check_branch
      %45 = sbr.rel (0) target = $region49
    $region48: #{net_forward.1} parent=1 // pred_region
      _
    $region49: #{net_forward.1} parent=1 // pred_fallthru
      _
    // Predicated region
    $region50: #{net_forward.1} parent=1 // pred_check
      _
    $region51: #{net_forward.1} parent=1 // pred_check_branch
      %47 = sbr.rel (0) target = $region53
    $region52: #{net_forward.1} parent=1 // pred_region
      _
    $region53: #{net_forward.1} parent=1 // pred_fallthru
      _
    %v49 = vld [vmem:[%s3] sm:$0x7]
    %v50 = vld [vmem:[%s0] sm:$0xff]
    %v51 = vld [vmem:[%s0 + $0x8] sm:$0xff]
    %v52 = vld [vmem:[%s0 + $0x10] sm:$0x11]
    %v53 = vld [vmem:[%s0 + $0x18] sm:$0x11]
    %v58 = vunpack.c.l.b16 %v50
    %v59 = vunpack.c.h.b16 %v50
    %v60 = vunpack.c.l.b16 %v51
    %v61 = vunpack.c.h.b16 %v51
    %v62 = vunpack.c.l.b16 %v52
    %v63 = vunpack.c.h.b16 %v52
    %v64 = vunpack.c.l.b16 %v53
    %v65 = vunpack.c.h.b16 %v53
    %v66 = vpack.c.b16 %v62, %v58
    %v67 = vpack.c.b16 %v63, %v59
    %v68 = vpack.c.b16 %v64, %v60
    %v69 = vpack.c.b16 %v65, %v61
    %vm70 = vcmask 72704
    %v72 = vsel %vm70, %v49, 0
    %vm74 = vcmask 1043456
    %vm75 = vcmask 1044480
    %v76 = vsel %vm74, 4294967295, 65535
    %v77 = vsel %vm75, %v76, 0
    %v79 = vand.u32 %v66, %v77
    %v82 = vand.u32 %v67, %v77
    %v85 = vand.u32 %v68, %v77
    %v88 = vand.u32 %v69, %v77
    %90 = vmatpush.bf16.msra.mxu0 0
    %91 = vmatpush.bf16.msra.mxu0 0
    %92 = vmatpush.bf16.msra.mxu0 0
    %93 = vmatpush.bf16.msra.mxu0 0
    %94 = vmatpush.bf16.msra.mxu0 0
    %95 = vmatpush.bf16.msra.mxu0 0
    %96 = vmatpush.bf16.msra.mxu0 0
    %97 = vmatpush.bf16.msra.mxu0 %v79
    %98 = vmatmul.bf16.gmra.mxu0 %v72
    %v99 = vpop.f32.mrf.mxu0
    %v100 = vadd.f32 0.0, %v99
    %v101 = vpop.f32.mrf.mxu0
    %102 = vdwg.mxu0
    %103 = vmatpush.bf16.msra.mxu0 0
    %104 = vmatpush.bf16.msra.mxu0 0
    %105 = vmatpush.bf16.msra.mxu0 0
    %106 = vmatpush.bf16.msra.mxu0 0
    %107 = vmatpush.bf16.msra.mxu0 0
    %108 = vmatpush.bf16.msra.mxu0 0
    %109 = vmatpush.bf16.msra.mxu0 0
    %110 = vmatpush.bf16.msra.mxu0 %v82
    %111 = vmatmul.bf16.gmra.mxu0 %v72
    %v112 = vpop.f32.mrf.mxu0
    %v113 = vadd.f32 0.0, %v112
    %v114 = vpop.f32.mrf.mxu0
    %115 = vdwg.mxu0
    %116 = vmatpush.bf16.msra.mxu0 0
    %117 = vmatpush.bf16.msra.mxu0 0
    %118 = vmatpush.bf16.msra.mxu0 0
    %119 = vmatpush.bf16.msra.mxu0 0
    %120 = vmatpush.bf16.msra.mxu0 0
    %121 = vmatpush.bf16.msra.mxu0 0
    %122 = vmatpush.bf16.msra.mxu0 0
    %123 = vmatpush.bf16.msra.mxu0 %v85
    %124 = vmatmul.bf16.gmra.mxu0 %v72
    %v125 = vpop.f32.mrf.mxu0
    %v126 = vadd.f32 0.0, %v125
    %v127 = vpop.f32.mrf.mxu0
    %128 = vdwg.mxu0
    %129 = vmatpush.bf16.msra.mxu0 0
    %130 = vmatpush.bf16.msra.mxu0 0
    %131 = vmatpush.bf16.msra.mxu0 0
    %132 = vmatpush.bf16.msra.mxu0 0
    %133 = vmatpush.bf16.msra.mxu0 0
    %134 = vmatpush.bf16.msra.mxu0 0
    %135 = vmatpush.bf16.msra.mxu0 0
    %136 = vmatpush.bf16.msra.mxu0 %v88
    %137 = vmatmul.bf16.gmra.mxu0 %v72
    %v138 = vpop.f32.mrf.mxu0
    %v139 = vadd.f32 0.0, %v138
    %v140 = vpop.f32.mrf.mxu0
    %141 = vdwg.mxu0
    %v142 = vld [vmem:[%s1] sm:$0xf]
    %v144 = vperm.slane %v142, 0
    %v145 = vperm.slane %v142, 1
    %v146 = vperm.slane %v142, 2
    %v147 = vperm.slane %v142, 3
    %v152 = vmul.f32 %v100, %v144
    %v153 = vmul.f32 %v113, %v145
    %v154 = vmul.f32 %v126, %v146
    %v155 = vmul.f32 %v139, %v147
    %vm156 = vcmask 1045504
    %v157 = vsel %vm156, %v152, 0.0
    %v158 = vsel %vm156, %v153, 0.0
    %v159 = vadd.f32 %v157, %v158
    %v160 = vsel %vm156, %v154, 0.0
    %v161 = vadd.f32 %v159, %v160
    %v162 = vsel %vm156, %v155, 0.0
    %v163 = vadd.f32 %v161, %v162
    %164 = vadd.xlane.f32.xlu0 %v163
    %v165 = vpop.xlane.xlu0 %164
    %v166 = vrcp.pop 392.0
    %v167 = vmul.f32 392.0, %v166
    %v168 = vsub.f32 1.0, %v167
    %v169 = vmul.f32 %v166, %v168
    %v170 = vadd.f32 %v166, %v169
    %vm171 = vweird.f32 %v166
    %v172 = vsel %vm171, %v166, %v170
    %v173 = vmul.f32 %v165, %v172
    %v174 = vmul.f32 %v152, %v152
    %v175 = vmul.f32 %v153, %v153
    %v176 = vmul.f32 %v154, %v154
    %v177 = vmul.f32 %v155, %v155
    %v178 = vsel %vm156, %v174, 0.0
    %v179 = vsel %vm156, %v175, 0.0
    %v180 = vadd.f32 %v178, %v179
    %v181 = vsel %vm156, %v176, 0.0
    %v182 = vadd.f32 %v180, %v181
    %v183 = vsel %vm156, %v177, 0.0
    %v184 = vadd.f32 %v182, %v183
    %185 = vadd.xlane.f32.xlu0 %v184
    %v186 = vpop.xlane.xlu0 %185
    %v187 = vmul.f32 %v186, %v172
    %v188 = vmul.f32 %v173, %v173
    %v189 = vsub.f32 %v187, %v188
    %v190 = vld [vmem:[%s4] sm:$0x3f]
    %v191 = vadd.f32 %v189, 1e-05
    %v192 = vrsqrt.pop %v191
    %v193 = vmul.f32 %v192, %v191
    %v194 = vmul.f32 %v193, %v192
    %v195 = vmul.f32 0.5, %v194
    %v196 = vsub.f32 1.5, %v195
    %v197 = vmul.f32 %v192, %v196
    %vm198 = vweird.f32 %v191
    %vm199 = vweird.f32 %v192
    %vm200 = vmor %vm198, %vm199
    %v201 = vsel %vm200, %v192, %v197
    %v202 = vmul.f32 %v190, %v201
    %v203 = vld [vmem:[%s5] sm:$0x3f]
    %v204 = vmul.f32 %v173, %v202
    %v205 = vsub.f32 %v203, %v204
    %207 = vset.pattern.permute.xlu0 0
    %208 = vperm.xlu0 %207, %v202
    %v209 = vpop.permute.xlu0 %208
    %v211 = vmul.f32 %v100, %v209
    %v212 = vmul.f32 %v113, %v209
    %v213 = vmul.f32 %v126, %v209
    %v214 = vmul.f32 %v139, %v209
    %216 = vset.pattern.permute.xlu0 0
    %217 = vperm.xlu0 %216, %v205
    %v218 = vpop.permute.xlu0 %217
    %v220 = vadd.f32 %v211, %v218
    %v221 = vadd.f32 %v212, %v218
    %v222 = vadd.f32 %v213, %v218
    %v223 = vadd.f32 %v214, %v218
    %v224 = vmax.f32 %v220, 0.0
    %v225 = vmax.f32 %v221, 0.0
    %v226 = vmax.f32 %v222, 0.0
    %v227 = vmax.f32 %v223, 0.0
    %v228 = vmul.f32 %v224, %v144
    %v229 = vmul.f32 %v225, %v145
    %v230 = vmul.f32 %v226, %v146
    %v231 = vmul.f32 %v227, %v147
    %v232 = vpack.c.bf16 %v229, %v228
    %v233 = vpack.c.bf16 %v231, %v230
    %v234 = vld [vmem:[%s6] sm:$0xf]
    %v235 = vld [vmem:[%s6 + $0x4] sm:$0xf]
    %v236 = vld [vmem:[%s6 + $0x8] sm:$0xf]
    %v237 = vld [vmem:[%s6 + $0xc] sm:$0xf]
    %v238 = vld [vmem:[%s6 + $0x10] sm:$0xf]
    %v239 = vld [vmem:[%s6 + $0x14] sm:$0xf]
    %v240 = vld [vmem:[%s6 + $0x18] sm:$0xf]
    %v241 = vld [vmem:[%s6 + $0x1c] sm:$0xf]
    %v242 = vld [vmem:[%s6 + $0x20] sm:$0xf]
    %v243 = vld [vmem:[%s6 + $0x24] sm:$0xf]
    %v244 = vld [vmem:[%s6 + $0x28] sm:$0xf]
    %v245 = vld [vmem:[%s6 + $0x2c] sm:$0xf]
    %v246 = vld [vmem:[%s6 + $0x30] sm:$0xf]
    %v247 = vld [vmem:[%s6 + $0x34] sm:$0xf]
    %v248 = vld [vmem:[%s6 + $0x38] sm:$0xf]
    %v249 = vld [vmem:[%s6 + $0x3c] sm:$0xf]
    %v250 = vld [vmem:[%s6 + $0x40] sm:$0xf]
    %v251 = vld [vmem:[%s6 + $0x44] sm:$0xf]
    %252 = vst [vmem:[#allocation2] sm:$0xff] 0.0
    %253 = vst [vmem:[#allocation2 + $0x8] sm:$0xff] 0.0
    %v256 = vunpack.c.l.b16 %v234
    %v257 = vunpack.c.l.b16 %v235
    %v258 = vpack.c.b16 %v257, %v256
    %vm259 = vcmask 48128
    %v261 = vsel %vm259, %v258, 0
    %vm263 = vcmask 1042432
    %v265 = vsel %vm263, %v232, 0
    %267 = vmatpush.bf16.msra.mxu0 0
    %268 = vmatpush.bf16.msra.mxu0 0
    %269 = vmatpush.bf16.msra.mxu0 0
    %270 = vmatpush.bf16.msra.mxu0 0
    %271 = vmatpush.bf16.msra.mxu0 0
    %272 = vmatpush.bf16.msra.mxu0 0
    %273 = vmatpush.bf16.msra.mxu0 0
    %274 = vmatpush.bf16.msra.mxu0 %v265
    %275 = vmatmul.bf16.gmra.mxu0 %v261
    %v276 = vpop.f32.mrf.mxu0
    %v277 = vadd.f32 0.0, %v276
    %v278 = vpop.f32.mrf.mxu0
    %v279 = vadd.f32 0.0, %v278
    %280 = vdwg.mxu0
    %v281 = vld [vmem:[#allocation2] sm:$0xff]
    %v282 = vld [vmem:[#allocation2 + $0x8] sm:$0xff]
    %v283 = vadd.f32 %v281, %v277
    %v284 = vadd.f32 %v282, %v279
    %285 = vst [vmem:[#allocation2] sm:$0xff] %v283
    %286 = vst [vmem:[#allocation2 + $0x8] sm:$0xff] %v284
    %v289 = vunpack.c.l.b16 %v236
    %v290 = vunpack.c.l.b16 %v237
    %v291 = vpack.c.b16 %v290, %v289
    %v293 = vunpack.c.h.b16 %v232
    %v294 = vpack.c.b16 %v293, %v293
    %v296 = vsel %vm259, %v291, 0
    %v299 = vsel %vm263, %v294, 0
    %301 = vmatpush.bf16.msra.mxu0 0
    %302 = vmatpush.bf16.msra.mxu0 0
    %303 = vmatpush.bf16.msra.mxu0 0
    %304 = vmatpush.bf16.msra.mxu0 0
    %305 = vmatpush.bf16.msra.mxu0 0
    %306 = vmatpush.bf16.msra.mxu0 0
    %307 = vmatpush.bf16.msra.mxu0 0
    %308 = vmatpush.bf16.msra.mxu0 %v299
    %309 = vmatmul.bf16.gmra.mxu0 %v296
    %v310 = vpop.f32.mrf.mxu0
    %v311 = vadd.f32 0.0, %v310
    %v312 = vpop.f32.mrf.mxu0
    %v313 = vadd.f32 0.0, %v312
    %314 = vdwg.mxu0
    %v315 = vld [vmem:[#allocation2] sm:$0xff]
    %v316 = vld [vmem:[#allocation2 + $0x8] sm:$0xff]
    %v317 = vadd.f32 %v315, %v311
    %v318 = vadd.f32 %v316, %v313
    %319 = vst [vmem:[#allocation2] sm:$0xff] %v317
    %320 = vst [vmem:[#allocation2 + $0x8] sm:$0xff] %v318
    %v323 = vunpack.c.l.b16 %v238
    %v324 = vunpack.c.l.b16 %v239
    %v325 = vpack.c.b16 %v324, %v323
    %v327 = vsel %vm259, %v325, 0
    %329 = vmatpush.bf16.msra.mxu0 0
    %330 = vmatpush.bf16.msra.mxu0 0
    %331 = vmatpush.bf16.msra.mxu0 0
    %332 = vmatpush.bf16.msra.mxu0 0
    %333 = vmatpush.bf16.msra.mxu0 0
    %334 = vmatpush.bf16.msra.mxu0 0
    %335 = vmatpush.bf16.msra.mxu0 0
    %336 = vmatpush.bf16.msra.mxu0 %v265
    %337 = vmatmul.bf16.gmra.mxu0 %v327
    %v338 = vpop.f32.mrf.mxu0
    %v339 = vadd.f32 0.0, %v338
    %v340 = vpop.f32.mrf.mxu0
    %v341 = vadd.f32 0.0, %v340
    %342 = vdwg.mxu0
    %v343 = vld [vmem:[#allocation2] sm:$0xff]
    %v344 = vld [vmem:[#allocation2 + $0x8] sm:$0xff]
    %347 = vrot.lane.b32.xlu0 %v339, 127
    %v348 = vpop.permute.xlu0 %347
    %349 = vrot.lane.b32.xlu0 %v341, 127
    %v350 = vpop.permute.xlu0 %349
    %v353 = vadd.f32 %v343, %v348
    %v354 = vadd.f32 %v344, %v350
    %vm355 = vcmask 1039360
    %356 = vst.msk [vmem:[#allocation2] sm:$0xff] %vm355, %v353
    %357 = vst.msk [vmem:[#allocation2 + $0x8] sm:$0xff] %vm355, %v354
    %v360 = vunpack.c.l.b16 %v240
    %v361 = vunpack.c.l.b16 %v241
    %v362 = vpack.c.b16 %v361, %v360
    %v364 = vsel %vm259, %v362, 0
    %v367 = vsel %vm263, %v233, 0
    %369 = vmatpush.bf16.msra.mxu0 0
    %370 = vmatpush.bf16.msra.mxu0 0
    %371 = vmatpush.bf16.msra.mxu0 0
    %372 = vmatpush.bf16.msra.mxu0 0
    %373 = vmatpush.bf16.msra.mxu0 0
    %374 = vmatpush.bf16.msra.mxu0 0
    %375 = vmatpush.bf16.msra.mxu0 0
    %376 = vmatpush.bf16.msra.mxu0 %v367
    %377 = vmatmul.bf16.gmra.mxu0 %v364
    %v378 = vpop.f32.mrf.mxu0
    %v379 = vadd.f32 0.0, %v378
    %v380 = vpop.f32.mrf.mxu0
    %v381 = vadd.f32 0.0, %v380
    %382 = vdwg.mxu0
    %v383 = vld [vmem:[#allocation2] sm:$0xff]
    %v384 = vld [vmem:[#allocation2 + $0x8] sm:$0xff]
    %v385 = vadd.f32 %v383, %v379
    %v386 = vadd.f32 %v384, %v381
    %387 = vst [vmem:[#allocation2] sm:$0xff] %v385
    %388 = vst [vmem:[#allocation2 + $0x8] sm:$0xff] %v386
    %v391 = vunpack.c.l.b16 %v242
    %v392 = vunpack.c.l.b16 %v243
    %v393 = vpack.c.b16 %v392, %v391
    %v395 = vunpack.c.h.b16 %v233
    %v396 = vpack.c.b16 %v395, %v395
    %v398 = vsel %vm259, %v393, 0
    %v401 = vsel %vm263, %v396, 0
    %403 = vmatpush.bf16.msra.mxu0 0
    %404 = vmatpush.bf16.msra.mxu0 0
    %405 = vmatpush.bf16.msra.mxu0 0
    %406 = vmatpush.bf16.msra.mxu0 0
    %407 = vmatpush.bf16.msra.mxu0 0
    %408 = vmatpush.bf16.msra.mxu0 0
    %409 = vmatpush.bf16.msra.mxu0 0
    %410 = vmatpush.bf16.msra.mxu0 %v401
    %411 = vmatmul.bf16.gmra.mxu0 %v398
    %v412 = vpop.f32.mrf.mxu0
    %v413 = vadd.f32 0.0, %v412
    %v414 = vpop.f32.mrf.mxu0
    %v415 = vadd.f32 0.0, %v414
    %416 = vdwg.mxu0
    %v417 = vld [vmem:[#allocation2] sm:$0xff]
    %v418 = vld [vmem:[#allocation2 + $0x8] sm:$0xff]
    %v419 = vadd.f32 %v417, %v413
    %v420 = vadd.f32 %v418, %v415
    %421 = vst [vmem:[#allocation2] sm:$0xff] %v419
    %422 = vst [vmem:[#allocation2 + $0x8] sm:$0xff] %v420
    %v425 = vunpack.c.l.b16 %v244
    %v426 = vunpack.c.l.b16 %v245
    %v427 = vpack.c.b16 %v426, %v425
    %v429 = vsel %vm259, %v427, 0
    %431 = vmatpush.bf16.msra.mxu0 0
    %432 = vmatpush.bf16.msra.mxu0 0
    %433 = vmatpush.bf16.msra.mxu0 0
    %434 = vmatpush.bf16.msra.mxu0 0
    %435 = vmatpush.bf16.msra.mxu0 0
    %436 = vmatpush.bf16.msra.mxu0 0
    %437 = vmatpush.bf16.msra.mxu0 0
    %438 = vmatpush.bf16.msra.mxu0 %v367
    %439 = vmatmul.bf16.gmra.mxu0 %v429
    %v440 = vpop.f32.mrf.mxu0
    %v441 = vadd.f32 0.0, %v440
    %v442 = vpop.f32.mrf.mxu0
    %v443 = vadd.f32 0.0, %v442
    %444 = vdwg.mxu0
    %v445 = vld [vmem:[#allocation2] sm:$0xff]
    %v446 = vld [vmem:[#allocation2 + $0x8] sm:$0xff]
    %449 = vrot.lane.b32.xlu0 %v441, 127
    %v450 = vpop.permute.xlu0 %449
    %451 = vrot.lane.b32.xlu0 %v443, 127
    %v452 = vpop.permute.xlu0 %451
    %v455 = vadd.f32 %v445, %v450
    %v456 = vadd.f32 %v446, %v452
    %457 = vst.msk [vmem:[#allocation2] sm:$0xff] %vm355, %v455
    %458 = vst.msk [vmem:[#allocation2 + $0x8] sm:$0xff] %vm355, %v456
    %v461 = vunpack.c.l.b16 %v246
    %v462 = vunpack.c.l.b16 %v247
    %v463 = vpack.c.b16 %v462, %v461
    %v465 = vsel %vm259, %v463, 0
    %467 = vmatpush.bf16.msra.mxu0 0
    %468 = vmatpush.bf16.msra.mxu0 0
    %469 = vmatpush.bf16.msra.mxu0 0
    %470 = vmatpush.bf16.msra.mxu0 0
    %471 = vmatpush.bf16.msra.mxu0 0
    %472 = vmatpush.bf16.msra.mxu0 0
    %473 = vmatpush.bf16.msra.mxu0 0
    %474 = vmatpush.bf16.msra.mxu0 %v265
    %475 = vmatmul.bf16.gmra.mxu0 %v465
    %v476 = vpop.f32.mrf.mxu0
    %v477 = vadd.f32 0.0, %v476
    %v478 = vpop.f32.mrf.mxu0
    %v479 = vadd.f32 0.0, %v478
    %480 = vdwg.mxu0
    %v481 = vld [vmem:[#allocation2] sm:$0xff]
    %v482 = vld [vmem:[#allocation2 + $0x8] sm:$0xff]
    %485 = vrot.lane.b32.xlu0 %v477, 120
    %v486 = vpop.permute.xlu0 %485
    %487 = vrot.lane.b32.xlu0 %v479, 120
    %v488 = vpop.permute.xlu0 %487
    %v491 = vadd.f32 %v481, %v486
    %v492 = vadd.f32 %v482, %v488
    %vm493 = vcmask 982016
    %494 = vst.msk [vmem:[#allocation2] sm:$0xff] %vm493, %v491
    %495 = vst.msk [vmem:[#allocation2 + $0x8] sm:$0xff] %vm493, %v492
    %v498 = vunpack.c.l.b16 %v248
    %v499 = vunpack.c.l.b16 %v249
    %v500 = vpack.c.b16 %v499, %v498
    %v502 = vsel %vm259, %v500, 0
    %504 = vmatpush.bf16.msra.mxu0 0
    %505 = vmatpush.bf16.msra.mxu0 0
    %506 = vmatpush.bf16.msra.mxu0 0
    %507 = vmatpush.bf16.msra.mxu0 0
    %508 = vmatpush.bf16.msra.mxu0 0
    %509 = vmatpush.bf16.msra.mxu0 0
    %510 = vmatpush.bf16.msra.mxu0 0
    %511 = vmatpush.bf16.msra.mxu0 %v299
    %512 = vmatmul.bf16.gmra.mxu0 %v502
    %v513 = vpop.f32.mrf.mxu0
    %v514 = vadd.f32 0.0, %v513
    %v515 = vpop.f32.mrf.mxu0
    %v516 = vadd.f32 0.0, %v515
    %517 = vdwg.mxu0
    %v518 = vld [vmem:[#allocation2] sm:$0xff]
    %v519 = vld [vmem:[#allocation2 + $0x8] sm:$0xff]
    %522 = vrot.lane.b32.xlu0 %v514, 120
    %v523 = vpop.permute.xlu0 %522
    %524 = vrot.lane.b32.xlu0 %v516, 120
    %v525 = vpop.permute.xlu0 %524
    %v528 = vadd.f32 %v518, %v523
    %v529 = vadd.f32 %v519, %v525
    %530 = vst.msk [vmem:[#allocation2] sm:$0xff] %vm493, %v528
    %531 = vst.msk [vmem:[#allocation2 + $0x8] sm:$0xff] %vm493, %v529
    %v534 = vunpack.c.l.b16 %v250
    %v535 = vunpack.c.l.b16 %v251
    %v536 = vpack.c.b16 %v535, %v534
    %v538 = vsel %vm259, %v536, 0
    %540 = vmatpush.bf16.msra.mxu0 0
    %541 = vmatpush.bf16.msra.mxu0 0
    %542 = vmatpush.bf16.msra.mxu0 0
    %543 = vmatpush.bf16.msra.mxu0 0
    %544 = vmatpush.bf16.msra.mxu0 0
    %545 = vmatpush.bf16.msra.mxu0 0
    %546 = vmatpush.bf16.msra.mxu0 0
    %547 = vmatpush.bf16.msra.mxu0 %v265
    %548 = vmatmul.bf16.gmra.mxu0 %v538
    %v549 = vpop.f32.mrf.mxu0
    %v550 = vadd.f32 0.0, %v549
    %v551 = vpop.f32.mrf.mxu0
    %v552 = vadd.f32 0.0, %v551
    %553 = vdwg.mxu0
    %v554 = vld [vmem:[#allocation2] sm:$0xff]
    %v555 = vld [vmem:[#allocation2 + $0x8] sm:$0xff]
    %558 = vrot.lane.b32.xlu0 %v550, 119
    %v559 = vpop.permute.xlu0 %558
    %560 = vrot.lane.b32.xlu0 %v552, 119
    %v561 = vpop.permute.xlu0 %560
    %v564 = vadd.f32 %v554, %v559
    %v565 = vadd.f32 %v555, %v561
    %vm566 = vcmask 973824
    %567 = vst.msk [vmem:[#allocation2] sm:$0xff] %vm566, %v564
    %568 = vst.msk [vmem:[#allocation2 + $0x8] sm:$0xff] %vm566, %v565
    %v569 = vld [vmem:[#allocation2] sm:$0xff]
    %v570 = vld [vmem:[#allocation2 + $0x8] sm:$0xff]
    %v571 = vld [vmem:[%s2] sm:$0x1]
    %v573 = vperm.slane %v571, 0
    %v575 = vmul.f32 %v569, %v573
    %v576 = vmul.f32 %v570, %v573
    %577 = vadd.xlane.f32.xlu0 %v575
    %v578 = vpop.xlane.xlu0 %577
    %579 = vadd.xlane.f32.xlu0 %v576
    %v580 = vpop.xlane.xlu0 %579
    %v581 = vrcp.pop 98.0
    %v582 = vmul.f32 98.0, %v581
    %v583 = vsub.f32 1.0, %v582
    %v584 = vmul.f32 %v581, %v583
    %v585 = vadd.f32 %v581, %v584
    %vm586 = vweird.f32 %v581
    %v587 = vsel %vm586, %v581, %v585
    %v588 = vmul.f32 %v578, %v587
    %v589 = vmul.f32 %v580, %v587
    %v590 = vmul.f32 %v575, %v575
    %v591 = vmul.f32 %v576, %v576
    %592 = vadd.xlane.f32.xlu0 %v590
    %v593 = vpop.xlane.xlu0 %592
    %594 = vadd.xlane.f32.xlu0 %v591
    %v595 = vpop.xlane.xlu0 %594
    %v596 = vmul.f32 %v593, %v587
    %v597 = vmul.f32 %v595, %v587
    %v598 = vmul.f32 %v588, %v588
    %v599 = vmul.f32 %v589, %v589
    %v600 = vsub.f32 %v596, %v598
    %v601 = vsub.f32 %v597, %v599
    %v602 = vld [vmem:[%s7] sm:$0xff]
    %v603 = vld [vmem:[%s7 + $0x8] sm:$0xff]
    %v604 = vadd.f32 %v600, 1e-05
    %v605 = vadd.f32 %v601, 1e-05
    %v606 = vrsqrt.pop %v604
    %v607 = vmul.f32 %v606, %v604
    %v608 = vmul.f32 %v607, %v606
    %v609 = vmul.f32 0.5, %v608
    %v610 = vsub.f32 1.5, %v609
    %v611 = vmul.f32 %v606, %v610
    %vm612 = vweird.f32 %v604
    %vm613 = vweird.f32 %v606
    %vm614 = vmor %vm612, %vm613
    %v615 = vsel %vm614, %v606, %v611
    %v616 = vrsqrt.pop %v605
    %v617 = vmul.f32 %v616, %v605
    %v618 = vmul.f32 %v617, %v616
    %v619 = vmul.f32 0.5, %v618
    %v620 = vsub.f32 1.5, %v619
    %v621 = vmul.f32 %v616, %v620
    %vm622 = vweird.f32 %v605
    %vm623 = vweird.f32 %v616
    %vm624 = vmor %vm622, %vm623
    %v625 = vsel %vm624, %v616, %v621
    %v626 = vmul.f32 %v602, %v615
    %v627 = vmul.f32 %v603, %v625
    %v628 = vld [vmem:[%s8] sm:$0xff]
    %v629 = vld [vmem:[%s8 + $0x8] sm:$0xff]
    %v630 = vmul.f32 %v588, %v626
    %v631 = vmul.f32 %v589, %v627
    %v632 = vsub.f32 %v628, %v630
    %v633 = vsub.f32 %v629, %v631
    %635 = vset.pattern.permute.xlu0 0
    %636 = vperm.xlu0 %635, %v626
    %v637 = vpop.permute.xlu0 %636
    %640 = vset.pattern.permute.xlu0 0
    %641 = vperm.xlu0 %640, %v627
    %v642 = vpop.permute.xlu0 %641
    %v644 = vmul.f32 %v569, %v637
    %v645 = vmul.f32 %v570, %v642
    %647 = vset.pattern.permute.xlu0 0
    %648 = vperm.xlu0 %647, %v632
    %v649 = vpop.permute.xlu0 %648
    %652 = vset.pattern.permute.xlu0 0
    %653 = vperm.xlu0 %652, %v633
    %v654 = vpop.permute.xlu0 %653
    %v656 = vadd.f32 %v644, %v649
    %v657 = vadd.f32 %v645, %v654
    %v658 = vmax.f32 %v656, 0.0
    %v659 = vmax.f32 %v657, 0.0
    %vm660 = vcmask 516096
    %661 = vst.msk [vmem:[#allocation3] sm:$0x1] %vm660, %v658
    %v663 = vrot.slane %v658, 7
    %v664 = vrot.slane %v663, 2
    %665 = vrot.lane.b32.xlu0 %v664, 64
    %v666 = vpop.permute.xlu0 %665
    %vm668 = vcmask 1040896
    %669 = vst.msk [vmem:[#allocation3] sm:$0x1] %vm668, %v666
    %670 = vst.sshfl [vmem:[#allocation1] sm:$0xff pattern:$0x73625140] %v658
    %s671 = scalar_lea.vmem [#allocation1], 1
    %v672 = vld [vmem:[%s671] ss:$4 sm:$0xff]
    %674 = vst.msk [vmem:[#allocation3 + $0x2] sm:$0x1] %vm660, %v672
    %675 = vst.sshfl [vmem:[#allocation1] sm:$0xff pattern:$0x73625140] %v658
    %s676 = scalar_lea.vmem [#allocation1], 1
    %v677 = vld [vmem:[%s676] ss:$4 sm:$0xff]
    %v678 = vrot.slane %v677, 7
    %v679 = vrot.slane %v678, 2
    %680 = vrot.lane.b32.xlu0 %v679, 64
    %v681 = vpop.permute.xlu0 %680
    %683 = vst.msk [vmem:[#allocation3 + $0x2] sm:$0x1] %vm668, %v681
    %684 = vst.sshfl [vmem:[#allocation1] sm:$0xff pattern:$0x73625140] %v658
    %s685 = scalar_lea.vmem [#allocation1], 2
    %v686 = vld [vmem:[%s685] ss:$4 sm:$0xff]
    %688 = vst.msk [vmem:[#allocation3 + $0x4] sm:$0x1] %vm660, %v686
    %689 = vst.sshfl [vmem:[#allocation1] sm:$0xff pattern:$0x73625140] %v658
    %s690 = scalar_lea.vmem [#allocation1], 2
    %v691 = vld [vmem:[%s690] ss:$4 sm:$0xff]
    %v692 = vrot.slane %v691, 7
    %v693 = vrot.slane %v692, 2
    %694 = vrot.lane.b32.xlu0 %v693, 64
    %v695 = vpop.permute.xlu0 %694
    %697 = vst.msk [vmem:[#allocation3 + $0x4] sm:$0x1] %vm668, %v695
    %698 = vst.sshfl [vmem:[#allocation1] sm:$0xff pattern:$0x73625140] %v658
    %s699 = scalar_lea.vmem [#allocation1], 3
    %v700 = vld [vmem:[%s699] ss:$4 sm:$0xff]
    %702 = vst.msk [vmem:[#allocation3 + $0x6] sm:$0x1] %vm660, %v700
    %703 = vst.sshfl [vmem:[#allocation1] sm:$0xff pattern:$0x73625140] %v658
    %s704 = scalar_lea.vmem [#allocation1], 3
    %v705 = vld [vmem:[%s704] ss:$4 sm:$0xff]
    %v706 = vrot.slane %v705, 7
    %v707 = vrot.slane %v706, 2
    %708 = vrot.lane.b32.xlu0 %v707, 64
    %v709 = vpop.permute.xlu0 %708
    %711 = vst.msk [vmem:[#allocation3 + $0x6] sm:$0x1] %vm668, %v709
    %712 = vst.msk [vmem:[#allocation3 + $0x8] sm:$0x1] %vm660, %v659
    %v714 = vrot.slane %v659, 7
    %v715 = vrot.slane %v714, 2
    %716 = vrot.lane.b32.xlu0 %v715, 64
    %v717 = vpop.permute.xlu0 %716
    %719 = vst.msk [vmem:[#allocation3 + $0x8] sm:$0x1] %vm668, %v717
    %720 = vst.sshfl [vmem:[#allocation1] sm:$0xff pattern:$0x73625140] %v659
    %s721 = scalar_lea.vmem [#allocation1], 1
    %v722 = vld [vmem:[%s721] ss:$4 sm:$0xff]
    %724 = vst.msk [vmem:[#allocation3 + $0xa] sm:$0x1] %vm660, %v722
    %725 = vst.sshfl [vmem:[#allocation1] sm:$0xff pattern:$0x73625140] %v659
    %s726 = scalar_lea.vmem [#allocation1], 1
    %v727 = vld [vmem:[%s726] ss:$4 sm:$0xff]
    %v728 = vrot.slane %v727, 7
    %v729 = vrot.slane %v728, 2
    %730 = vrot.lane.b32.xlu0 %v729, 64
    %v731 = vpop.permute.xlu0 %730
    %733 = vst.msk [vmem:[#allocation3 + $0xa] sm:$0x1] %vm668, %v731
    %734 = vst.sshfl [vmem:[#allocation1] sm:$0xff pattern:$0x73625140] %v659
    %s735 = scalar_lea.vmem [#allocation1], 2
    %v736 = vld [vmem:[%s735] ss:$4 sm:$0xff]
    %738 = vst.msk [vmem:[#allocation3 + $0xc] sm:$0x1] %vm660, %v736
    %739 = vst.sshfl [vmem:[#allocation1] sm:$0xff pattern:$0x73625140] %v659
    %s740 = scalar_lea.vmem [#allocation1], 2
    %v741 = vld [vmem:[%s740] ss:$4 sm:$0xff]
    %v742 = vrot.slane %v741, 7
    %v743 = vrot.slane %v742, 2
    %744 = vrot.lane.b32.xlu0 %v743, 64
    %v745 = vpop.permute.xlu0 %744
    %747 = vst.msk [vmem:[#allocation3 + $0xc] sm:$0x1] %vm668, %v745
    %748 = vst.sshfl [vmem:[#allocation1] sm:$0xff pattern:$0x73625140] %v659
    %s749 = scalar_lea.vmem [#allocation1], 3
    %v750 = vld [vmem:[%s749] ss:$4 sm:$0xff]
    %752 = vst.msk [vmem:[#allocation3 + $0xe] sm:$0x1] %vm660, %v750
    %753 = vst.sshfl [vmem:[#allocation1] sm:$0xff pattern:$0x73625140] %v659
    %s754 = scalar_lea.vmem [#allocation1], 3
    %v755 = vld [vmem:[%s754] ss:$4 sm:$0xff]
    %v756 = vrot.slane %v755, 7
    %v757 = vrot.slane %v756, 2
    %758 = vrot.lane.b32.xlu0 %v757, 64
    %v759 = vpop.permute.xlu0 %758
    %761 = vst.msk [vmem:[#allocation3 + $0xe] sm:$0x1] %vm668, %v759
    %762 = vrot.lane.b32.xlu0 %v658, 64
    %v763 = vpop.permute.xlu0 %762
    %765 = vst.msk [vmem:[#allocation3 + $0x1] sm:$0x1] %vm660, %v763
    %767 = vst.msk [vmem:[#allocation3 + $0x1] sm:$0x1] %vm668, %v664
    %768 = vst.sshfl [vmem:[#allocation1] sm:$0xff pattern:$0x73625140] %v658
    %s769 = scalar_lea.vmem [#allocation1], 1
    %v770 = vld [vmem:[%s769] ss:$4 sm:$0xff]
    %771 = vrot.lane.b32.xlu0 %v770, 64
    %v772 = vpop.permute.xlu0 %771
    %774 = vst.msk [vmem:[#allocation3 + $0x3] sm:$0x1] %vm660, %v772
    %775 = vst.sshfl [vmem:[#allocation1] sm:$0xff pattern:$0x73625140] %v658
    %s776 = scalar_lea.vmem [#allocation1], 1
    %v777 = vld [vmem:[%s776] ss:$4 sm:$0xff]
    %v778 = vrot.slane %v777, 7
    %v779 = vrot.slane %v778, 2
    %781 = vst.msk [vmem:[#allocation3 + $0x3] sm:$0x1] %vm668, %v779
    %782 = vst.sshfl [vmem:[#allocation1] sm:$0xff pattern:$0x73625140] %v658
    %s783 = scalar_lea.vmem [#allocation1], 2
    %v784 = vld [vmem:[%s783] ss:$4 sm:$0xff]
    %785 = vrot.lane.b32.xlu0 %v784, 64
    %v786 = vpop.permute.xlu0 %785
    %788 = vst.msk [vmem:[#allocation3 + $0x5] sm:$0x1] %vm660, %v786
    %789 = vst.sshfl [vmem:[#allocation1] sm:$0xff pattern:$0x73625140] %v658
    %s790 = scalar_lea.vmem [#allocation1], 2
    %v791 = vld [vmem:[%s790] ss:$4 sm:$0xff]
    %v792 = vrot.slane %v791, 7
    %v793 = vrot.slane %v792, 2
    %795 = vst.msk [vmem:[#allocation3 + $0x5] sm:$0x1] %vm668, %v793
    %796 = vst.sshfl [vmem:[#allocation1] sm:$0xff pattern:$0x73625140] %v658
    %s797 = scalar_lea.vmem [#allocation1], 3
    %v798 = vld [vmem:[%s797] ss:$4 sm:$0xff]
    %799 = vrot.lane.b32.xlu0 %v798, 64
    %v800 = vpop.permute.xlu0 %799
    %802 = vst.msk [vmem:[#allocation3 + $0x7] sm:$0x1] %vm660, %v800
    %803 = vst.sshfl [vmem:[#allocation1] sm:$0xff pattern:$0x73625140] %v658
    %s804 = scalar_lea.vmem [#allocation1], 3
    %v805 = vld [vmem:[%s804] ss:$4 sm:$0xff]
    %v806 = vrot.slane %v805, 7
    %v807 = vrot.slane %v806, 2
    %809 = vst.msk [vmem:[#allocation3 + $0x7] sm:$0x1] %vm668, %v807
    %810 = vrot.lane.b32.xlu0 %v659, 64
    %v811 = vpop.permute.xlu0 %810
    %813 = vst.msk [vmem:[#allocation3 + $0x9] sm:$0x1] %vm660, %v811
    %815 = vst.msk [vmem:[#allocation3 + $0x9] sm:$0x1] %vm668, %v715
    %816 = vst.sshfl [vmem:[#allocation1] sm:$0xff pattern:$0x73625140] %v659
    %s817 = scalar_lea.vmem [#allocation1], 1
    %v818 = vld [vmem:[%s817] ss:$4 sm:$0xff]
    %819 = vrot.lane.b32.xlu0 %v818, 64
    %v820 = vpop.permute.xlu0 %819
    %822 = vst.msk [vmem:[#allocation3 + $0xb] sm:$0x1] %vm660, %v820
    %823 = vst.sshfl [vmem:[#allocation1] sm:$0xff pattern:$0x73625140] %v659
    %s824 = scalar_lea.vmem [#allocation1], 1
    %v825 = vld [vmem:[%s824] ss:$4 sm:$0xff]
    %v826 = vrot.slane %v825, 7
    %v827 = vrot.slane %v826, 2
    %829 = vst.msk [vmem:[#allocation3 + $0xb] sm:$0x1] %vm668, %v827
    %830 = vst.sshfl [vmem:[#allocation1] sm:$0xff pattern:$0x73625140] %v659
    %s831 = scalar_lea.vmem [#allocation1], 2
    %v832 = vld [vmem:[%s831] ss:$4 sm:$0xff]
    %833 = vrot.lane.b32.xlu0 %v832, 64
    %v834 = vpop.permute.xlu0 %833
    %836 = vst.msk [vmem:[#allocation3 + $0xd] sm:$0x1] %vm660, %v834
    %837 = vst.sshfl [vmem:[#allocation1] sm:$0xff pattern:$0x73625140] %v659
    %s838 = scalar_lea.vmem [#allocation1], 2
    %v839 = vld [vmem:[%s838] ss:$4 sm:$0xff]
    %v840 = vrot.slane %v839, 7
    %v841 = vrot.slane %v840, 2
    %843 = vst.msk [vmem:[#allocation3 + $0xd] sm:$0x1] %vm668, %v841
    %844 = vst.sshfl [vmem:[#allocation1] sm:$0xff pattern:$0x73625140] %v659
    %s845 = scalar_lea.vmem [#allocation1], 3
    %v846 = vld [vmem:[%s845] ss:$4 sm:$0xff]
    %847 = vrot.lane.b32.xlu0 %v846, 64
    %v848 = vpop.permute.xlu0 %847
    %850 = vst.msk [vmem:[#allocation3 + $0xf] sm:$0x1] %vm660, %v848
    %851 = vst.sshfl [vmem:[#allocation1] sm:$0xff pattern:$0x73625140] %v659
    %s852 = scalar_lea.vmem [#allocation1], 3
    %v853 = vld [vmem:[%s852] ss:$4 sm:$0xff]
    %v854 = vrot.slane %v853, 7
    %v855 = vrot.slane %v854, 2
    %857 = vst.msk [vmem:[#allocation3 + $0xf] sm:$0x1] %vm668, %v855
    %v858 = vld [vmem:[#allocation3] sm:$0xff]
    %v859 = vld [vmem:[#allocation3 + $0x8] sm:$0xff]
    %862 = vst [vmem:[#allocation1] ss:$4 sm:$0xff] %v858
    %s863 = scalar_lea.vmem [#allocation1], 32
    %864 = vst [vmem:[%s863] ss:$4 sm:$0xff] %v859
    %v865 = vld.sshfl [vmem:[#allocation1] sm:$0xff pattern:$0x73625140]
    %v866 = vld.sshfl [vmem:[#allocation1 + $0x8] sm:$0xff pattern:$0x73625140]
    %v867 = vld.sshfl [vmem:[#allocation1 + $0x10] sm:$0xff pattern:$0x73625140]
    %v868 = vld.sshfl [vmem:[#allocation1 + $0x18] sm:$0xff pattern:$0x73625140]
    %v869 = vld.sshfl [vmem:[#allocation1 + $0x20] sm:$0xff pattern:$0x73625140]
    %v870 = vld.sshfl [vmem:[#allocation1 + $0x28] sm:$0xff pattern:$0x73625140]
    %v871 = vld.sshfl [vmem:[#allocation1 + $0x30] sm:$0xff pattern:$0x73625140]
    %v872 = vld.sshfl [vmem:[#allocation1 + $0x38] sm:$0xff pattern:$0x73625140]
    %v881 = vpack.c.bf16 %v865, %v865
    %v882 = vpack.c.bf16 %v866, %v866
    %v883 = vpack.c.bf16 %v867, %v867
    %v884 = vpack.c.bf16 %v868, %v868
    %v885 = vpack.c.bf16 %v869, %v869
    %v886 = vpack.c.bf16 %v870, %v870
    %v887 = vpack.c.bf16 %v871, %v871
    %v888 = vpack.c.bf16 %v872, %v872
    %v889 = vld [vmem:[%s9] sm:$0xf]
    %v890 = vld [vmem:[%s9 + $0x4] sm:$0xf]
    %v891 = vld [vmem:[%s9 + $0x8] sm:$0xf]
    %v892 = vld [vmem:[%s9 + $0xc] sm:$0xf]
    %v893 = vld [vmem:[%s9 + $0x10] sm:$0xf]
    %v894 = vld [vmem:[%s9 + $0x14] sm:$0xf]
    %v895 = vld [vmem:[%s9 + $0x18] sm:$0xf]
    %v896 = vld [vmem:[%s9 + $0x1c] sm:$0xf]
    %v897 = vld [vmem:[%s9 + $0x20] sm:$0xf]
    %v898 = vld [vmem:[%s9 + $0x24] sm:$0xf]
    %v899 = vld [vmem:[%s9 + $0x28] sm:$0xf]
    %v900 = vld [vmem:[%s9 + $0x2c] sm:$0xf]
    %v901 = vld [vmem:[%s9 + $0x30] sm:$0xf]
    %v902 = vld [vmem:[%s9 + $0x34] sm:$0xf]
    %v903 = vld [vmem:[%s9 + $0x38] sm:$0xf]
    %v904 = vld [vmem:[%s9 + $0x3c] sm:$0xf]
    %v905 = vld [vmem:[%s9 + $0x40] sm:$0xf]
    %v906 = vld [vmem:[%s9 + $0x44] sm:$0xf]
    %v907 = vld [vmem:[%s9 + $0x48] sm:$0xf]
    %v908 = vld [vmem:[%s9 + $0x4c] sm:$0xf]
    %v909 = vld [vmem:[%s9 + $0x50] sm:$0xf]
    %v910 = vld [vmem:[%s9 + $0x54] sm:$0xf]
    %v911 = vld [vmem:[%s9 + $0x58] sm:$0xf]
    %v912 = vld [vmem:[%s9 + $0x5c] sm:$0xf]
    %v913 = vld [vmem:[%s9 + $0x60] sm:$0xf]
    %v914 = vld [vmem:[%s9 + $0x64] sm:$0xf]
    %v915 = vld [vmem:[%s9 + $0x68] sm:$0xf]
    %v916 = vld [vmem:[%s9 + $0x6c] sm:$0xf]
    %v917 = vld [vmem:[%s9 + $0x70] sm:$0xf]
    %v918 = vld [vmem:[%s9 + $0x74] sm:$0xf]
    %v919 = vld [vmem:[%s9 + $0x78] sm:$0xf]
    %v920 = vld [vmem:[%s9 + $0x7c] sm:$0xf]
    %v921 = vld [vmem:[%s9 + $0x80] sm:$0xf]
    %v922 = vld [vmem:[%s9 + $0x84] sm:$0xf]
    %v923 = vld [vmem:[%s9 + $0x88] sm:$0xf]
    %v924 = vld [vmem:[%s9 + $0x8c] sm:$0xf]
    %v925 = vld [vmem:[%s9 + $0x90] sm:$0xf]
    %v926 = vld [vmem:[%s9 + $0x94] sm:$0xf]
    %v927 = vld [vmem:[%s9 + $0x98] sm:$0xf]
    %v928 = vld [vmem:[%s9 + $0x9c] sm:$0xf]
    %v929 = vld [vmem:[%s9 + $0xa0] sm:$0xf]
    %v930 = vld [vmem:[%s9 + $0xa4] sm:$0xf]
    %v931 = vld [vmem:[%s9 + $0xa8] sm:$0xf]
    %v932 = vld [vmem:[%s9 + $0xac] sm:$0xf]
    %v933 = vld [vmem:[%s9 + $0xb0] sm:$0xf]
    %v934 = vld [vmem:[%s9 + $0xb4] sm:$0xf]
    %v935 = vld [vmem:[%s9 + $0xb8] sm:$0xf]
    %v936 = vld [vmem:[%s9 + $0xbc] sm:$0xf]
    %v937 = vld [vmem:[%s9 + $0xc0] sm:$0xf]
    %v938 = vld [vmem:[%s9 + $0xc4] sm:$0xf]
    %v939 = vld [vmem:[%s9 + $0xc8] sm:$0xf]
    %v940 = vld [vmem:[%s9 + $0xcc] sm:$0xf]
    %v941 = vld [vmem:[%s9 + $0xd0] sm:$0xf]
    %v942 = vld [vmem:[%s9 + $0xd4] sm:$0xf]
    %v943 = vld [vmem:[%s9 + $0xd8] sm:$0xf]
    %v944 = vld [vmem:[%s9 + $0xdc] sm:$0xf]
    %v945 = vld [vmem:[%s9 + $0xe0] sm:$0xf]
    %v946 = vld [vmem:[%s9 + $0xe4] sm:$0xf]
    %v947 = vld [vmem:[%s9 + $0xe8] sm:$0xf]
    %v948 = vld [vmem:[%s9 + $0xec] sm:$0xf]
    %v949 = vld [vmem:[%s9 + $0xf0] sm:$0xf]
    %v950 = vld [vmem:[%s9 + $0xf4] sm:$0xf]
    %v951 = vld [vmem:[%s9 + $0xf8] sm:$0xf]
    %v952 = vld [vmem:[%s9 + $0xfc] sm:$0xf]
    %v953 = vld [vmem:[%s9 + $0x100] sm:$0xf]
    %v954 = vld [vmem:[%s9 + $0x104] sm:$0xf]
    %v955 = vld [vmem:[%s9 + $0x108] sm:$0xf]
    %v956 = vld [vmem:[%s9 + $0x10c] sm:$0xf]
    %v957 = vld [vmem:[%s9 + $0x110] sm:$0xf]
    %v958 = vld [vmem:[%s9 + $0x114] sm:$0xf]
    %v959 = vld [vmem:[%s9 + $0x118] sm:$0xf]
    %v960 = vld [vmem:[%s9 + $0x11c] sm:$0xf]
    %v961 = vld [vmem:[%s9 + $0x120] sm:$0xf]
    %v962 = vld [vmem:[%s9 + $0x124] sm:$0xf]
    %v963 = vld [vmem:[%s9 + $0x128] sm:$0xf]
    %v964 = vld [vmem:[%s9 + $0x12c] sm:$0xf]
    %v965 = vld [vmem:[%s9 + $0x130] sm:$0xf]
    %v966 = vld [vmem:[%s9 + $0x134] sm:$0xf]
    %v967 = vld [vmem:[%s9 + $0x138] sm:$0xf]
    %v968 = vld [vmem:[%s9 + $0x13c] sm:$0xf]
    %v969 = vld [vmem:[%s9 + $0x140] sm:$0xf]
    %v970 = vld [vmem:[%s9 + $0x144] sm:$0xf]
    %v971 = vld [vmem:[%s9 + $0x148] sm:$0xf]
    %v972 = vld [vmem:[%s9 + $0x14c] sm:$0xf]
    %v973 = vld [vmem:[%s9 + $0x150] sm:$0xf]
    %v974 = vld [vmem:[%s9 + $0x154] sm:$0xf]
    %v975 = vld [vmem:[%s9 + $0x158] sm:$0xf]
    %v976 = vld [vmem:[%s9 + $0x15c] sm:$0xf]
    %v977 = vld [vmem:[%s9 + $0x160] sm:$0xf]
    %v978 = vld [vmem:[%s9 + $0x164] sm:$0xf]
    %v979 = vld [vmem:[%s9 + $0x168] sm:$0xf]
    %v980 = vld [vmem:[%s9 + $0x16c] sm:$0xf]
    %v981 = vld [vmem:[%s9 + $0x170] sm:$0xf]
    %v982 = vld [vmem:[%s9 + $0x174] sm:$0xf]
    %v983 = vld [vmem:[%s9 + $0x178] sm:$0xf]
    %v984 = vld [vmem:[%s9 + $0x17c] sm:$0xf]
    %v985 = vld [vmem:[%s9 + $0x180] sm:$0xf]
    %v986 = vld [vmem:[%s9 + $0x184] sm:$0xf]
    %v987 = vld [vmem:[%s9 + $0x188] sm:$0xf]
    %v988 = vld [vmem:[%s9 + $0x18c] sm:$0xf]
    %v989 = vld [vmem:[%s9 + $0x190] sm:$0xf]
    %v990 = vld [vmem:[%s9 + $0x194] sm:$0xf]
    %v991 = vld [vmem:[%s9 + $0x198] sm:$0xf]
    %v992 = vld [vmem:[%s9 + $0x19c] sm:$0xf]
    %v993 = vld [vmem:[%s9 + $0x1a0] sm:$0xf]
    %v994 = vld [vmem:[%s9 + $0x1a4] sm:$0xf]
    %v995 = vld [vmem:[%s9 + $0x1a8] sm:$0xf]
    %v996 = vld [vmem:[%s9 + $0x1ac] sm:$0xf]
    %v997 = vld [vmem:[%s9 + $0x1b0] sm:$0xf]
    %v998 = vld [vmem:[%s9 + $0x1b4] sm:$0xf]
    %v999 = vld [vmem:[%s9 + $0x1b8] sm:$0xf]
    %v1000 = vld [vmem:[%s9 + $0x1bc] sm:$0xf]
    %v1001 = vld [vmem:[%s9 + $0x1c0] sm:$0xf]
    %v1002 = vld [vmem:[%s9 + $0x1c4] sm:$0xf]
    %v1003 = vld [vmem:[%s9 + $0x1c8] sm:$0xf]
    %v1004 = vld [vmem:[%s9 + $0x1cc] sm:$0xf]
    %v1005 = vld [vmem:[%s9 + $0x1d0] sm:$0xf]
    %v1006 = vld [vmem:[%s9 + $0x1d4] sm:$0xf]
    %v1007 = vld [vmem:[%s9 + $0x1d8] sm:$0xf]
    %v1008 = vld [vmem:[%s9 + $0x1dc] sm:$0xf]
    %v1009 = vld [vmem:[%s9 + $0x1e0] sm:$0xf]
    %v1010 = vld [vmem:[%s9 + $0x1e4] sm:$0xf]
    %v1011 = vld [vmem:[%s9 + $0x1e8] sm:$0xf]
    %v1012 = vld [vmem:[%s9 + $0x1ec] sm:$0xf]
    %v1013 = vld [vmem:[%s9 + $0x1f0] sm:$0xf]
    %v1014 = vld [vmem:[%s9 + $0x1f4] sm:$0xf]
    %v1015 = vld [vmem:[%s9 + $0x1f8] sm:$0xf]
    %v1016 = vld [vmem:[%s9 + $0x1fc] sm:$0xf]
    %v1017 = vld [vmem:[%s10] sm:$0x1]
    %v1019 = vperm.slane %v1017, 0
    %v1149 = vunpack.c.l.b16 %v889
    %v1150 = vunpack.c.l.b16 %v890
    %v1151 = vunpack.c.l.b16 %v891
    %v1152 = vunpack.c.l.b16 %v892
    %v1153 = vunpack.c.l.b16 %v893
    %v1154 = vunpack.c.l.b16 %v894
    %v1155 = vunpack.c.l.b16 %v895
    %v1156 = vunpack.c.l.b16 %v896
    %v1157 = vunpack.c.l.b16 %v897
    %v1158 = vunpack.c.l.b16 %v898
    %v1159 = vunpack.c.l.b16 %v899
    %v1160 = vunpack.c.l.b16 %v900
    %v1161 = vunpack.c.l.b16 %v901
    %v1162 = vunpack.c.l.b16 %v902
    %v1163 = vunpack.c.l.b16 %v903
    %v1164 = vunpack.c.l.b16 %v904
    %v1165 = vunpack.c.l.b16 %v905
    %v1166 = vunpack.c.l.b16 %v906
    %v1167 = vunpack.c.l.b16 %v907
    %v1168 = vunpack.c.l.b16 %v908
    %v1169 = vunpack.c.l.b16 %v909
    %v1170 = vunpack.c.l.b16 %v910
    %v1171 = vunpack.c.l.b16 %v911
    %v1172 = vunpack.c.l.b16 %v912
    %v1173 = vunpack.c.l.b16 %v913
    %v1174 = vunpack.c.l.b16 %v914
    %v1175 = vunpack.c.l.b16 %v915
    %v1176 = vunpack.c.l.b16 %v916
    %v1177 = vunpack.c.l.b16 %v917
    %v1178 = vunpack.c.l.b16 %v918
    %v1179 = vunpack.c.l.b16 %v919
    %v1180 = vunpack.c.l.b16 %v920
    %v1181 = vunpack.c.l.b16 %v921
    %v1182 = vunpack.c.l.b16 %v922
    %v1183 = vunpack.c.l.b16 %v923
    %v1184 = vunpack.c.l.b16 %v924
    %v1185 = vunpack.c.l.b16 %v925
    %v1186 = vunpack.c.l.b16 %v926
    %v1187 = vunpack.c.l.b16 %v927
    %v1188 = vunpack.c.l.b16 %v928
    %v1189 = vunpack.c.l.b16 %v929
    %v1190 = vunpack.c.l.b16 %v930
    %v1191 = vunpack.c.l.b16 %v931
    %v1192 = vunpack.c.l.b16 %v932
    %v1193 = vunpack.c.l.b16 %v933
    %v1194 = vunpack.c.l.b16 %v934
    %v1195 = vunpack.c.l.b16 %v935
    %v1196 = vunpack.c.l.b16 %v936
    %v1197 = vunpack.c.l.b16 %v937
    %v1198 = vunpack.c.l.b16 %v938
    %v1199 = vunpack.c.l.b16 %v939
    %v1200 = vunpack.c.l.b16 %v940
    %v1201 = vunpack.c.l.b16 %v941
    %v1202 = vunpack.c.l.b16 %v942
    %v1203 = vunpack.c.l.b16 %v943
    %v1204 = vunpack.c.l.b16 %v944
    %v1205 = vunpack.c.l.b16 %v945
    %v1206 = vunpack.c.l.b16 %v946
    %v1207 = vunpack.c.l.b16 %v947
    %v1208 = vunpack.c.l.b16 %v948
    %v1209 = vunpack.c.l.b16 %v949
    %v1210 = vunpack.c.l.b16 %v950
    %v1211 = vunpack.c.l.b16 %v951
    %v1212 = vunpack.c.l.b16 %v952
    %v1213 = vunpack.c.l.b16 %v953
    %v1214 = vunpack.c.l.b16 %v954
    %v1215 = vunpack.c.l.b16 %v955
    %v1216 = vunpack.c.l.b16 %v956
    %v1217 = vunpack.c.l.b16 %v957
    %v1218 = vunpack.c.l.b16 %v958
    %v1219 = vunpack.c.l.b16 %v959
    %v1220 = vunpack.c.l.b16 %v960
    %v1221 = vunpack.c.l.b16 %v961
    %v1222 = vunpack.c.l.b16 %v962
    %v1223 = vunpack.c.l.b16 %v963
    %v1224 = vunpack.c.l.b16 %v964
    %v1225 = vunpack.c.l.b16 %v965
    %v1226 = vunpack.c.l.b16 %v966
    %v1227 = vunpack.c.l.b16 %v967
    %v1228 = vunpack.c.l.b16 %v968
    %v1229 = vunpack.c.l.b16 %v969
    %v1230 = vunpack.c.l.b16 %v970
    %v1231 = vunpack.c.l.b16 %v971
    %v1232 = vunpack.c.l.b16 %v972
    %v1233 = vunpack.c.l.b16 %v973
    %v1234 = vunpack.c.l.b16 %v974
    %v1235 = vunpack.c.l.b16 %v975
    %v1236 = vunpack.c.l.b16 %v976
    %v1237 = vunpack.c.l.b16 %v977
    %v1238 = vunpack.c.l.b16 %v978
    %v1239 = vunpack.c.l.b16 %v979
    %v1240 = vunpack.c.l.b16 %v980
    %v1241 = vunpack.c.l.b16 %v981
    %v1242 = vunpack.c.l.b16 %v982
    %v1243 = vunpack.c.l.b16 %v983
    %v1244 = vunpack.c.l.b16 %v984
    %v1245 = vunpack.c.l.b16 %v985
    %v1246 = vunpack.c.l.b16 %v986
    %v1247 = vunpack.c.l.b16 %v987
    %v1248 = vunpack.c.l.b16 %v988
    %v1249 = vunpack.c.l.b16 %v989
    %v1250 = vunpack.c.l.b16 %v990
    %v1251 = vunpack.c.l.b16 %v991
    %v1252 = vunpack.c.l.b16 %v992
    %v1253 = vunpack.c.l.b16 %v993
    %v1254 = vunpack.c.l.b16 %v994
    %v1255 = vunpack.c.l.b16 %v995
    %v1256 = vunpack.c.l.b16 %v996
    %v1257 = vunpack.c.l.b16 %v997
    %v1258 = vunpack.c.l.b16 %v998
    %v1259 = vunpack.c.l.b16 %v999
    %v1260 = vunpack.c.l.b16 %v1000
    %v1261 = vunpack.c.l.b16 %v1001
    %v1262 = vunpack.c.l.b16 %v1002
    %v1263 = vunpack.c.l.b16 %v1003
    %v1264 = vunpack.c.l.b16 %v1004
    %v1265 = vunpack.c.l.b16 %v1005
    %v1266 = vunpack.c.l.b16 %v1006
    %v1267 = vunpack.c.l.b16 %v1007
    %v1268 = vunpack.c.l.b16 %v1008
    %v1269 = vunpack.c.l.b16 %v1009
    %v1270 = vunpack.c.l.b16 %v1010
    %v1271 = vunpack.c.l.b16 %v1011
    %v1272 = vunpack.c.l.b16 %v1012
    %v1273 = vunpack.c.l.b16 %v1013
    %v1274 = vunpack.c.l.b16 %v1014
    %v1275 = vunpack.c.l.b16 %v1015
    %v1276 = vunpack.c.l.b16 %v1016
    %v1277 = vpack.c.b16 %v1150, %v1149
    %v1278 = vpack.c.b16 %v1152, %v1151
    %v1279 = vpack.c.b16 %v1154, %v1153
    %v1280 = vpack.c.b16 %v1156, %v1155
    %v1281 = vpack.c.b16 %v1158, %v1157
    %v1282 = vpack.c.b16 %v1160, %v1159
    %v1283 = vpack.c.b16 %v1162, %v1161
    %v1284 = vpack.c.b16 %v1164, %v1163
    %v1285 = vpack.c.b16 %v1166, %v1165
    %v1286 = vpack.c.b16 %v1168, %v1167
    %v1287 = vpack.c.b16 %v1170, %v1169
    %v1288 = vpack.c.b16 %v1172, %v1171
    %v1289 = vpack.c.b16 %v1174, %v1173
    %v1290 = vpack.c.b16 %v1176, %v1175
    %v1291 = vpack.c.b16 %v1178, %v1177
    %v1292 = vpack.c.b16 %v1180, %v1179
    %v1293 = vpack.c.b16 %v1182, %v1181
    %v1294 = vpack.c.b16 %v1184, %v1183
    %v1295 = vpack.c.b16 %v1186, %v1185
    %v1296 = vpack.c.b16 %v1188, %v1187
    %v1297 = vpack.c.b16 %v1190, %v1189
    %v1298 = vpack.c.b16 %v1192, %v1191
    %v1299 = vpack.c.b16 %v1194, %v1193
    %v1300 = vpack.c.b16 %v1196, %v1195
    %v1301 = vpack.c.b16 %v1198, %v1197
    %v1302 = vpack.c.b16 %v1200, %v1199
    %v1303 = vpack.c.b16 %v1202, %v1201
    %v1304 = vpack.c.b16 %v1204, %v1203
    %v1305 = vpack.c.b16 %v1206, %v1205
    %v1306 = vpack.c.b16 %v1208, %v1207
    %v1307 = vpack.c.b16 %v1210, %v1209
    %v1308 = vpack.c.b16 %v1212, %v1211
    %v1309 = vpack.c.b16 %v1214, %v1213
    %v1310 = vpack.c.b16 %v1216, %v1215
    %v1311 = vpack.c.b16 %v1218, %v1217
    %v1312 = vpack.c.b16 %v1220, %v1219
    %v1313 = vpack.c.b16 %v1222, %v1221
    %v1314 = vpack.c.b16 %v1224, %v1223
    %v1315 = vpack.c.b16 %v1226, %v1225
    %v1316 = vpack.c.b16 %v1228, %v1227
    %v1317 = vpack.c.b16 %v1230, %v1229
    %v1318 = vpack.c.b16 %v1232, %v1231
    %v1319 = vpack.c.b16 %v1234, %v1233
    %v1320 = vpack.c.b16 %v1236, %v1235
    %v1321 = vpack.c.b16 %v1238, %v1237
    %v1322 = vpack.c.b16 %v1240, %v1239
    %v1323 = vpack.c.b16 %v1242, %v1241
    %v1324 = vpack.c.b16 %v1244, %v1243
    %v1325 = vpack.c.b16 %v1246, %v1245
    %v1326 = vpack.c.b16 %v1248, %v1247
    %v1327 = vpack.c.b16 %v1250, %v1249
    %v1328 = vpack.c.b16 %v1252, %v1251
    %v1329 = vpack.c.b16 %v1254, %v1253
    %v1330 = vpack.c.b16 %v1256, %v1255
    %v1331 = vpack.c.b16 %v1258, %v1257
    %v1332 = vpack.c.b16 %v1260, %v1259
    %v1333 = vpack.c.b16 %v1262, %v1261
    %v1334 = vpack.c.b16 %v1264, %v1263
    %v1335 = vpack.c.b16 %v1266, %v1265
    %v1336 = vpack.c.b16 %v1268, %v1267
    %v1337 = vpack.c.b16 %v1270, %v1269
    %v1338 = vpack.c.b16 %v1272, %v1271
    %v1339 = vpack.c.b16 %v1274, %v1273
    %v1340 = vpack.c.b16 %v1276, %v1275
    %1405 = vmatpush.bf16.msra.mxu0 %v1284
    %1406 = vmatpush.bf16.msra.mxu0 %v1283
    %1407 = vmatpush.bf16.msra.mxu0 %v1282
    %1408 = vmatpush.bf16.msra.mxu0 %v1281
    %1409 = vmatpush.bf16.msra.mxu0 %v1280
    %1410 = vmatpush.bf16.msra.mxu0 %v1279
    %1411 = vmatpush.bf16.msra.mxu0 %v1278
    %1412 = vmatpush.bf16.msra.mxu0 %v1277
    %1413 = vmatmul.bf16.gmra.mxu0 %v881
    %v1414 = vpop.f32.mrf.mxu0
    %v1415 = vadd.f32 %v1019, %v1414
    %v1416 = vpop.f32.mrf.mxu0
    %1417 = vdwg.mxu0
    %1418 = vmatpush.bf16.msra.mxu0 %v1292
    %1419 = vmatpush.bf16.msra.mxu0 %v1291
    %1420 = vmatpush.bf16.msra.mxu0 %v1290
    %1421 = vmatpush.bf16.msra.mxu0 %v1289
    %1422 = vmatpush.bf16.msra.mxu0 %v1288
    %1423 = vmatpush.bf16.msra.mxu0 %v1287
    %1424 = vmatpush.bf16.msra.mxu0 %v1286
    %1425 = vmatpush.bf16.msra.mxu0 %v1285
    %1426 = vmatmul.bf16.gmra.mxu0 %v882
    %v1427 = vpop.f32.mrf.mxu0
    %v1428 = vadd.f32 %v1415, %v1427
    %v1429 = vpop.f32.mrf.mxu0
    %1430 = vdwg.mxu0
    %1431 = vmatpush.bf16.msra.mxu0 %v1300
    %1432 = vmatpush.bf16.msra.mxu0 %v1299
    %1433 = vmatpush.bf16.msra.mxu0 %v1298
    %1434 = vmatpush.bf16.msra.mxu0 %v1297
    %1435 = vmatpush.bf16.msra.mxu0 %v1296
    %1436 = vmatpush.bf16.msra.mxu0 %v1295
    %1437 = vmatpush.bf16.msra.mxu0 %v1294
    %1438 = vmatpush.bf16.msra.mxu0 %v1293
    %1439 = vmatmul.bf16.gmra.mxu0 %v883
    %v1440 = vpop.f32.mrf.mxu0
    %v1441 = vadd.f32 %v1428, %v1440
    %v1442 = vpop.f32.mrf.mxu0
    %1443 = vdwg.mxu0
    %1444 = vmatpush.bf16.msra.mxu0 %v1308
    %1445 = vmatpush.bf16.msra.mxu0 %v1307
    %1446 = vmatpush.bf16.msra.mxu0 %v1306
    %1447 = vmatpush.bf16.msra.mxu0 %v1305
    %1448 = vmatpush.bf16.msra.mxu0 %v1304
    %1449 = vmatpush.bf16.msra.mxu0 %v1303
    %1450 = vmatpush.bf16.msra.mxu0 %v1302
    %1451 = vmatpush.bf16.msra.mxu0 %v1301
    %1452 = vmatmul.bf16.gmra.mxu0 %v884
    %v1453 = vpop.f32.mrf.mxu0
    %v1454 = vadd.f32 %v1441, %v1453
    %v1455 = vpop.f32.mrf.mxu0
    %1456 = vdwg.mxu0
    %1457 = vmatpush.bf16.msra.mxu0 %v1316
    %1458 = vmatpush.bf16.msra.mxu0 %v1315
    %1459 = vmatpush.bf16.msra.mxu0 %v1314
    %1460 = vmatpush.bf16.msra.mxu0 %v1313
    %1461 = vmatpush.bf16.msra.mxu0 %v1312
    %1462 = vmatpush.bf16.msra.mxu0 %v1311
    %1463 = vmatpush.bf16.msra.mxu0 %v1310
    %1464 = vmatpush.bf16.msra.mxu0 %v1309
    %1465 = vmatmul.bf16.gmra.mxu0 %v885
    %v1466 = vpop.f32.mrf.mxu0
    %v1467 = vadd.f32 %v1454, %v1466
    %v1468 = vpop.f32.mrf.mxu0
    %1469 = vdwg.mxu0
    %1470 = vmatpush.bf16.msra.mxu0 %v1324
    %1471 = vmatpush.bf16.msra.mxu0 %v1323
    %1472 = vmatpush.bf16.msra.mxu0 %v1322
    %1473 = vmatpush.bf16.msra.mxu0 %v1321
    %1474 = vmatpush.bf16.msra.mxu0 %v1320
    %1475 = vmatpush.bf16.msra.mxu0 %v1319
    %1476 = vmatpush.bf16.msra.mxu0 %v1318
    %1477 = vmatpush.bf16.msra.mxu0 %v1317
    %1478 = vmatmul.bf16.gmra.mxu0 %v886
    %v1479 = vpop.f32.mrf.mxu0
    %v1480 = vadd.f32 %v1467, %v1479
    %v1481 = vpop.f32.mrf.mxu0
    %1482 = vdwg.mxu0
    %1483 = vmatpush.bf16.msra.mxu0 %v1332
    %1484 = vmatpush.bf16.msra.mxu0 %v1331
    %1485 = vmatpush.bf16.msra.mxu0 %v1330
    %1486 = vmatpush.bf16.msra.mxu0 %v1329
    %1487 = vmatpush.bf16.msra.mxu0 %v1328
    %1488 = vmatpush.bf16.msra.mxu0 %v1327
    %1489 = vmatpush.bf16.msra.mxu0 %v1326
    %1490 = vmatpush.bf16.msra.mxu0 %v1325
    %1491 = vmatmul.bf16.gmra.mxu0 %v887
    %v1492 = vpop.f32.mrf.mxu0
    %v1493 = vadd.f32 %v1480, %v1492
    %v1494 = vpop.f32.mrf.mxu0
    %1495 = vdwg.mxu0
    %1496 = vmatpush.bf16.msra.mxu0 %v1340
    %1497 = vmatpush.bf16.msra.mxu0 %v1339
    %1498 = vmatpush.bf16.msra.mxu0 %v1338
    %1499 = vmatpush.bf16.msra.mxu0 %v1337
    %1500 = vmatpush.bf16.msra.mxu0 %v1336
    %1501 = vmatpush.bf16.msra.mxu0 %v1335
    %1502 = vmatpush.bf16.msra.mxu0 %v1334
    %1503 = vmatpush.bf16.msra.mxu0 %v1333
    %1504 = vmatmul.bf16.gmra.mxu0 %v888
    %v1505 = vpop.f32.mrf.mxu0
    %v1506 = vadd.f32 %v1493, %v1505
    %v1507 = vpop.f32.mrf.mxu0
    %1508 = vdwg.mxu0
    %v1509 = vpack.c.bf16 %v1506, %v1506
    %v1510 = vld [vmem:[%s11] sm:$0xf]
    %v1511 = vld [vmem:[%s11 + $0x4] sm:$0xf]
    %v1512 = vld [vmem:[%s11 + $0x8] sm:$0xf]
    %v1513 = vld [vmem:[%s11 + $0xc] sm:$0xf]
    %v1514 = vld [vmem:[%s12] sm:$0x1]
    %v1516 = vperm.slane %v1514, 0
    %v1522 = vunpack.c.l.b16 %v1510
    %v1523 = vunpack.c.l.b16 %v1511
    %v1524 = vunpack.c.l.b16 %v1512
    %v1525 = vunpack.c.l.b16 %v1513
    %v1526 = vpack.c.b16 %v1523, %v1522
    %v1527 = vpack.c.b16 %v1525, %v1524
    %vm1530 = vcmask 261120
    %v1532 = vsel %vm1530, %v1509, 0
    %1534 = vmatpush.bf16.msra.mxu0 0
    %1535 = vmatpush.bf16.msra.mxu0 0
    %1536 = vmatpush.bf16.msra.mxu0 0
    %1537 = vmatpush.bf16.msra.mxu0 0
    %1538 = vmatpush.bf16.msra.mxu0 0
    %1539 = vmatpush.bf16.msra.mxu0 0
    %1540 = vmatpush.bf16.msra.mxu0 %v1527
    %1541 = vmatpush.bf16.msra.mxu0 %v1526
    %1542 = vmatmul.bf16.gmra.mxu0 %v1532
    %v1543 = vpop.f32.mrf.mxu0
    %v1544 = vadd.f32 %v1516, %v1543
    %v1545 = vpop.f32.mrf.mxu0
    %1546 = vdwg.mxu0
    %vm1547 = vcmask 74752
    %1548 = vst.msk [vmem:[#allocation6] sm:$0x3] %vm1547, %v1544
    %v1549 = vsel %vm1547, %v1544, -inf
    %1550 = vmax.xlane.f32.xlu0 %v1549
    %v1551 = vpop.xlane.xlu0 %1550
    %v1552 = vsub.f32 %v1544, %v1551
    %v1553 = vmul.f32 %v1552, 1.442695
    %v1554 = vpow.pop %v1553
    %v1555 = vsel %vm1547, %v1554, 0.0
    %1556 = vadd.xlane.f32.xlu0 %v1555
    %v1557 = vpop.xlane.xlu0 %1556
    %v1558 = vlog2.pop %v1557
    %v1559 = vmul.f32 %v1558, 0.6931472
    %v1560 = vadd.f32 %v1559, %v1551
    %v1561 = vsub.f32 %v1544, %v1560
    %1562 = vst.msk [vmem:[#allocation4] sm:$0x3] %vm1547, %v1561
    // Predicated region
    $region54: #{net_forward.1} parent=1 // pred_check
      _
    $region55: #{net_forward.1} parent=1 // pred_check_branch
      %1564 = sbr.rel (0) target = $region57
    $region56: #{net_forward.1} parent=1 // pred_region
      %1566 = vsyncadd [#allocation5], 0
      %s1568 = sshll.u32 [#allocation4], 4
      %s1569 = int_to_ptr.vmem [resolvable:$true] %s1568
      %s1570 = sshll.u32 %s13, 4
      %s1571 = int_to_ptr.hbm [resolvable:$true] %s1570
      %1573 = dma.vmem_to_hbm [thread:$0]  %s1569, 32, %s1571, [#allocation5]
    $region57: #{net_forward.1} parent=1 // pred_fallthru
      _
    // Predicated region
    $region58: #{net_forward.1} parent=1 // pred_check
      _
    $region59: #{net_forward.1} parent=1 // pred_check_branch
      %1575 = sbr.rel (0) target = $region61
    $region60: #{net_forward.1} parent=1 // pred_region
      %1577 = vsyncadd [#allocation7], 0
      %s1579 = sshll.u32 [#allocation6], 4
      %s1580 = int_to_ptr.vmem [resolvable:$true] %s1579
      %s1581 = sshll.u32 %s14, 4
      %s1582 = int_to_ptr.hbm [resolvable:$true] %s1581
      %1584 = dma.vmem_to_hbm [thread:$0]  %s1580, 32, %s1582, [#allocation7]
    $region61: #{net_forward.1} parent=1 // pred_fallthru
      _
    // Predicated region
    $region62: #{net_forward.1} parent=1 // pred_check
      _
    $region63: #{net_forward.1} parent=1 // pred_check_branch
      %1586 = sbr.rel (0) target = $region65
    $region64: #{net_forward.1} parent=1 // pred_region
      %1588 = dma.done [#allocation5], 32
    $region65: #{net_forward.1} parent=1 // pred_fallthru
      _
    // Predicated region
    $region66: #{net_forward.1} parent=1 // pred_check
      _
    $region67: #{net_forward.1} parent=1 // pred_check_branch
      %1590 = sbr.rel (0) target = $region69
    $region68: #{net_forward.1} parent=1 // pred_region
      %1592 = dma.done [#allocation7], 32
    $region69: #{net_forward.1} parent=1 // pred_fallthru
      _
    %1593 = vsyncpa [#allocation5], 1
    %1594 = vsyncpa [#allocation7], 1

</llo_original>
